<compile_context>
chip_gen: v7x
topology: tpu7x:2x2x1
jax: 0.10.0
libtpu: 0.0.40
codegen_flags: <defaults>
</compile_context>

<pallas_src>
import functools

import jax
import jax.numpy as jnp
from jax.experimental import pallas as pl
from jax.experimental.pallas import tpu as pltpu


# ------------------------------ fused kernel --------------------------------

def _bert_fused_kernel(h0_ref, mask_ref, eg_ref, eb_ref,
                       wqkv_ref, bqkv_ref, wo_ref, bo_ref,
                       ln1g_ref, ln1b_ref, w1_ref, b1_ref, w2_ref, b2_ref,
                       ln2g_ref, ln2b_ref,
                       pw_ref, pb_ref, fw_ref, fb_ref,
                       out_ref, h_ref, ctx_ref,
                       *, S, nH, D, ln_eps):
    """grid = (batch, layer); one step == one encoder layer of one example.

    Hidden state for the current example lives in VMEM (h_ref) across the
    layer axis; per-layer weights are streamed (double-buffered) by BlockSpec.
    """
    H = nH * D
    layer = pl.program_id(1)
    bf16 = jnp.bfloat16

    def layernorm(x, g, b):
        # Single-pass stats: independent E[x] and E[x^2]; var = E[x^2] - mu^2.
        mu = jnp.mean(x, axis=-1, keepdims=True)
        msq = jnp.mean(x * x, axis=-1, keepdims=True)
        var = msq - mu * mu
        return (x - mu) * jax.lax.rsqrt(var + ln_eps) * g + b

    # Layer 0 seeds the VMEM-resident hidden-state carry with the embedding LN.
    @pl.when(layer == 0)
    def _():
        h_ref[...] = layernorm(h0_ref[0], eg_ref[...], eb_ref[...])

    h = h_ref[...]                                            # (S, H) f32

    # ---- fused QKV projection: one MXU pass, lane width 3H, bf16 in / f32 acc
    qkv = (jnp.dot(h.astype(bf16), wqkv_ref[0],
                   preferred_element_type=jnp.float32) + bqkv_ref[0])   # (S, 3H)

    # ---- head-batched attention: two batched dot_generals over (nH, S, D) ----
    def heads(off):                                           # (nH, S, D)
        return jnp.stack(
            [qkv[:, off + hh * D: off + (hh + 1) * D] for hh in range(nH)],
            axis=0)

    q3, k3, v3 = heads(0), heads(H), heads(2 * H)

    scale = 1.0 / float(D) ** 0.5
    s = jax.lax.dot_general(q3, k3, (((2,), (2,)), ((0,), (0,))),
                            preferred_element_type=jnp.float32)         # (nH, S, S)
    s = s * scale + mask_ref[0]                               # (1, S) bcast over keys
    s = s - jnp.max(s, axis=-1, keepdims=True)
    p = jnp.exp(s)
    p = p * pl.reciprocal(jnp.sum(p, axis=-1, keepdims=True), approx=True)
    ctx = jax.lax.dot_general(p.astype(bf16), v3.astype(bf16),
                              (((2,), (1,)), ((0,), (0,))),
                              preferred_element_type=jnp.float32)        # (nH, S, D)

    # Scatter head outputs straight into an (S, H) VMEM scratch (no concatenate).
    for hh in range(nH):
        ctx_ref[:, hh * D:(hh + 1) * D] = ctx[hh]

    # ---- output projection + residual + LayerNorm ----
    attn_out = (jnp.dot(ctx_ref[...].astype(bf16), wo_ref[0],
                        preferred_element_type=jnp.float32) + bo_ref[0])
    h1 = layernorm(h + attn_out, ln1g_ref[0], ln1b_ref[0])

    # ---- FFN (gelu, tanh approximation) + residual + LayerNorm ----
    # TODO(synk): HF BertModel default hidden_act='gelu' is erf-based; the tanh
    # approximation used here differs by <1e-3 relative.
    ffn = (jnp.dot(h1.astype(bf16), w1_ref[0],
                   preferred_element_type=jnp.float32) + b1_ref[0])
    c = 0.7978845608028654  # sqrt(2/pi)
    ffn = 0.5 * ffn * (1.0 + jnp.tanh(c * (ffn + 0.044715 * ffn * ffn * ffn)))
    ffn = (jnp.dot(ffn.astype(bf16), w2_ref[0],
                   preferred_element_type=jnp.float32) + b2_ref[0])
    h2 = layernorm(h1 + ffn, ln2g_ref[0], ln2b_ref[0])

    h_ref[...] = h2                                           # carry to next layer

    # Last layer: fused pooler (tanh on the CLS row) + final fc(256).
    @pl.when(layer == pl.num_programs(1) - 1)
    def _():
        cls = h2[0:1, :]                                      # CLS row of this example
        pooled = jnp.tanh(
            jnp.dot(cls.astype(bf16), pw_ref[...],
                    preferred_element_type=jnp.float32) + pb_ref[...])
        out_ref[0] = (jnp.dot(pooled.astype(bf16), fw_ref[...],
                              preferred_element_type=jnp.float32)
                      + fb_ref[...]).astype(out_ref.dtype)


# --------------------------- parameter creation ------------------------------

def init_params(key, cfg):
    H, I = cfg["hidden"], cfg["intermediate"]
    keys = iter(jax.random.split(key, 64))

    def nrm(shape):
        return jax.random.normal(next(keys), shape, jnp.float32) * 0.02

    def zeros(n):
        return jnp.zeros((1, n), jnp.float32)

    p = {
        "word_emb": nrm((cfg["vocab"], H)),
        "pos_emb": nrm((cfg["max_pos"], H)),
        "type_emb": nrm((2, H)),
        "emb_ln_g": jnp.ones((1, H), jnp.float32),
        "emb_ln_b": jnp.zeros((1, H), jnp.float32),
        "pool_w": nrm((H, H)), "pool_b": zeros(H),
        "fc_w": nrm((H, cfg["fc_out"])), "fc_b": zeros(cfg["fc_out"]),
        "layers": [],
    }
    for _ in range(cfg["layers"]):
        p["layers"].append({
            "wq": nrm((H, H)), "bq": zeros(H),
            "wk": nrm((H, H)), "bk": zeros(H),
            "wv": nrm((H, H)), "bv": zeros(H),
            "wo": nrm((H, H)), "bo": zeros(H),
            "ln1_g": jnp.ones((1, H), jnp.float32),
            "ln1_b": jnp.zeros((1, H), jnp.float32),
            "w1": nrm((H, I)), "b1": zeros(I),
            "w2": nrm((I, H)), "b2": zeros(H),
            "ln2_g": jnp.ones((1, H), jnp.float32),
            "ln2_b": jnp.zeros((1, H), jnp.float32),
        })
    return p


# ------------------------------- forward pass --------------------------------

def bert_text_model_forward(params, input_ids, attention_mask, cfg):
    B, S = input_ids.shape
    H, nH = cfg["hidden"], cfg["heads"]
    I, L = cfg["intermediate"], cfg["layers"]
    D = H // nH
    fc_out = cfg["fc_out"]
    bf16 = jnp.bfloat16

    # Embedding gathers stay in plain JAX (glue); everything downstream runs in
    # the single fused Pallas kernel.  token_type_ids are assumed all-zero.
    h0 = (params["word_emb"][input_ids]
          + params["pos_emb"][jnp.arange(S)][None, :, :]
          + params["type_emb"][0][None, None, :])                     # (B, S, H)

    # Additive attention mask hoisted out of the kernel (built once).
    add_mask = ((1.0 - attention_mask.astype(jnp.float32)) * -10000.0
                ).reshape(B, 1, S)

    # Stack per-layer weights along a leading layer axis; matmul weights in bf16.
    def stk(name, dt=jnp.float32):
        return jnp.stack([lyr[name] for lyr in params["layers"]], 0).astype(dt)

    wqkv = jnp.stack([jnp.concatenate([lyr["wq"], lyr["wk"], lyr["wv"]], axis=1)
                      for lyr in params["layers"]], 0).astype(bf16)    # (L, H, 3H)
    bqkv = jnp.stack([jnp.concatenate([lyr["bq"], lyr["bk"], lyr["bv"]], axis=1)
                      for lyr in params["layers"]], 0)                 # (L, 1, 3H)

    inputs = (h0, add_mask, params["emb_ln_g"], params["emb_ln_b"],
              wqkv, bqkv, stk("wo", bf16), stk("bo"),
              stk("ln1_g"), stk("ln1_b"), stk("w1", bf16), stk("b1"),
              stk("w2", bf16), stk("b2"), stk("ln2_g"), stk("ln2_b"),
              params["pool_w"].astype(bf16), params["pool_b"],
              params["fc_w"].astype(bf16), params["fc_b"])

    def full(shape):       # shared across every grid step (resident once)
        return pl.BlockSpec(shape, lambda b, l, _n=len(shape): (0,) * _n)

    def per_batch(shape):  # (B, *shape): one example's slice per batch step
        return pl.BlockSpec((1,) + shape, lambda b, l: (b, 0, 0))

    def per_layer(shape):  # (L, *shape): one layer's slice per layer step
        return pl.BlockSpec((1,) + shape, lambda b, l: (l, 0, 0))

    in_specs = [
        per_batch((S, H)), per_batch((1, S)), full((1, H)), full((1, H)),
        per_layer((H, 3 * H)), per_layer((1, 3 * H)),
        per_layer((H, H)), per_layer((1, H)),
        per_layer((1, H)), per_layer((1, H)),
        per_layer((H, I)), per_layer((1, I)),
        per_layer((I, H)), per_layer((1, H)),
        per_layer((1, H)), per_layer((1, H)),
        full((H, H)), full((1, H)),
        full((H, fc_out)), full((1, fc_out)),
    ]

    kernel = functools.partial(_bert_fused_kernel,
                               S=S, nH=nH, D=D, ln_eps=1e-12)
    out = pl.pallas_call(
        kernel,
        out_shape=jax.ShapeDtypeStruct((B, 1, fc_out), jnp.float32),
        grid_spec=pltpu.PrefetchScalarGridSpec(
            num_scalar_prefetch=0,
            grid=(B, L),                       # batch parallel, layers sequential
            in_specs=in_specs,
            out_specs=pl.BlockSpec((1, 1, fc_out), lambda b, l: (b, 0, 0)),
            scratch_shapes=[pltpu.VMEM((S, H), jnp.float32),   # hidden-state carry
                            pltpu.VMEM((S, H), jnp.float32)],  # attn ctx assembly
        ),
        compiler_params=pltpu.CompilerParams(
            dimension_semantics=("parallel", "arbitrary"),
            vmem_limit_bytes=32 * 1024 * 1024),
    )(*inputs)
    return out.reshape(B, fc_out)


# ----------------------------------- main ------------------------------------

if __name__ == "__main__":
    cfg = dict(vocab=100, hidden=32, heads=4, intermediate=64,
               layers=2, max_pos=16, fc_out=256)

    key = jax.random.PRNGKey(0)
    k_params, k_ids = jax.random.split(key)

    params = init_params(k_params, cfg)

    B, S = 2, 8
    input_ids = jax.random.randint(k_ids, (B, S), 0, cfg["vocab"], dtype=jnp.int32)
    attention_mask = jnp.ones((B, S), jnp.int32).at[1, 6:].set(0)  # pad last 2 of row 1

    forward = jax.jit(lambda p, ids, m: bert_text_model_forward(p, ids, m, cfg))
    out = forward(params, input_ids, attention_mask)
    out = jax.block_until_ready(out)

    assert out.shape == (B, 256) and out.dtype == jnp.float32
    assert bool(jnp.all(jnp.isfinite(out)))
    print("KERNEL_OK")
</pallas_src>

<mosaic_0001>
module attributes {stable_mosaic.version = 11 : i64} {
  func.func @_bert_fused_kernel(%arg0: i32, %arg1: i32, %arg2: memref<1x8x32xf32, #tpu.memory_space<vmem>>, %arg3: memref<1x1x8xf32, #tpu.memory_space<vmem>>, %arg4: memref<1x32xf32, #tpu.memory_space<vmem>>, %arg5: memref<1x32xf32, #tpu.memory_space<vmem>>, %arg6: memref<1x32x96xbf16, #tpu.memory_space<vmem>>, %arg7: memref<1x1x96xf32, #tpu.memory_space<vmem>>, %arg8: memref<1x32x32xbf16, #tpu.memory_space<vmem>>, %arg9: memref<1x1x32xf32, #tpu.memory_space<vmem>>, %arg10: memref<1x1x32xf32, #tpu.memory_space<vmem>>, %arg11: memref<1x1x32xf32, #tpu.memory_space<vmem>>, %arg12: memref<1x32x64xbf16, #tpu.memory_space<vmem>>, %arg13: memref<1x1x64xf32, #tpu.memory_space<vmem>>, %arg14: memref<1x64x32xbf16, #tpu.memory_space<vmem>>, %arg15: memref<1x1x32xf32, #tpu.memory_space<vmem>>, %arg16: memref<1x1x32xf32, #tpu.memory_space<vmem>>, %arg17: memref<1x1x32xf32, #tpu.memory_space<vmem>>, %arg18: memref<32x32xbf16, #tpu.memory_space<vmem>>, %arg19: memref<1x32xf32, #tpu.memory_space<vmem>>, %arg20: memref<32x256xbf16, #tpu.memory_space<vmem>>, %arg21: memref<1x256xf32, #tpu.memory_space<vmem>>, %arg22: memref<1x1x256xf32, #tpu.memory_space<vmem>>, %arg23: memref<8x32xf32, #tpu.memory_space<vmem>>, %arg24: memref<8x32xf32, #tpu.memory_space<vmem>>) attributes {dimension_semantics = [#tpu.dimension_semantics<parallel>, #tpu.dimension_semantics<arbitrary>], iteration_bounds = array<i64: 2, 2>, scalar_prefetch = 0 : i64, scratch_operands = 2 : i64, tpu.core_type = #tpu.core_type<tc>, window_params = [{transform_indices = @transform_0, window_bounds = array<i64: 1, 8, 32>}, {transform_indices = @transform_1, window_bounds = array<i64: 1, 1, 8>}, {pipeline_mode = #tpu.pipeline_mode<synchronous>, transform_indices = @transform_2, window_bounds = array<i64: 1, 32>}, {pipeline_mode = #tpu.pipeline_mode<synchronous>, transform_indices = @transform_3, window_bounds = array<i64: 1, 32>}, {transform_indices = @transform_4, window_bounds = array<i64: 1, 32, 96>}, {transform_indices = @transform_5, window_bounds = array<i64: 1, 1, 96>}, {transform_indices = @transform_6, window_bounds = array<i64: 1, 32, 32>}, {transform_indices = @transform_7, window_bounds = array<i64: 1, 1, 32>}, {transform_indices = @transform_8, window_bounds = array<i64: 1, 1, 32>}, {transform_indices = @transform_9, window_bounds = array<i64: 1, 1, 32>}, {transform_indices = @transform_10, window_bounds = array<i64: 1, 32, 64>}, {transform_indices = @transform_11, window_bounds = array<i64: 1, 1, 64>}, {transform_indices = @transform_12, window_bounds = array<i64: 1, 64, 32>}, {transform_indices = @transform_13, window_bounds = array<i64: 1, 1, 32>}, {transform_indices = @transform_14, window_bounds = array<i64: 1, 1, 32>}, {transform_indices = @transform_15, window_bounds = array<i64: 1, 1, 32>}, {pipeline_mode = #tpu.pipeline_mode<synchronous>, transform_indices = @transform_16, window_bounds = array<i64: 32, 32>}, {pipeline_mode = #tpu.pipeline_mode<synchronous>, transform_indices = @transform_17, window_bounds = array<i64: 1, 32>}, {pipeline_mode = #tpu.pipeline_mode<synchronous>, transform_indices = @transform_18, window_bounds = array<i64: 32, 256>}, {pipeline_mode = #tpu.pipeline_mode<synchronous>, transform_indices = @transform_19, window_bounds = array<i64: 1, 256>}, {transform_indices = @transform_20, window_bounds = array<i64: 1, 1, 256>}]} {
    %c0_i32 = arith.constant 0 : i32
    %0 = arith.cmpi eq, %arg1, %c0_i32 : i32
    %1 = arith.extui %0 : i1 to i32
    %c0_i32_0 = arith.constant 0 : i32
    %2 = arith.cmpi ne, %1, %c0_i32_0 : i32
    scf.if %2 {
      %c0_73 = arith.constant 0 : index
      %c0_74 = arith.constant 0 : index
      %c0_75 = arith.constant 0 : index
      %168 = vector.load %arg2[%c0_73, %c0_74, %c0_75] : memref<1x8x32xf32, #tpu.memory_space<vmem>>, vector<1x8x32xf32>
      %169 = vector.shape_cast %168 : vector<1x8x32xf32> to vector<8x32xf32>
      %c0_76 = arith.constant 0 : index
      %c0_77 = arith.constant 0 : index
      %170 = vector.load %arg4[%c0_76, %c0_77] : memref<1x32xf32, #tpu.memory_space<vmem>>, vector<1x32xf32>
      %c0_78 = arith.constant 0 : index
      %c0_79 = arith.constant 0 : index
      %171 = vector.load %arg5[%c0_78, %c0_79] : memref<1x32xf32, #tpu.memory_space<vmem>>, vector<1x32xf32>
      %cst_80 = arith.constant dense<0.000000e+00> : vector<8xf32>
      %172 = vector.multi_reduction <add>, %169, %cst_80 [1] : vector<8x32xf32> to vector<8xf32>
      %173 = vector.shape_cast %172 : vector<8xf32> to vector<8x1xf32>
      %cst_81 = arith.constant 3.200000e+01 : f32
      %174 = vector.broadcast %cst_81 : f32 to vector<8x1xf32>
      %175 = arith.divf %173, %174 : vector<8x1xf32>
      %176 = arith.mulf %169, %169 : vector<8x32xf32>
      %cst_82 = arith.constant dense<0.000000e+00> : vector<8xf32>
      %177 = vector.multi_reduction <add>, %176, %cst_82 [1] : vector<8x32xf32> to vector<8xf32>
      %178 = vector.shape_cast %177 : vector<8xf32> to vector<8x1xf32>
      %cst_83 = arith.constant 3.200000e+01 : f32
      %179 = vector.broadcast %cst_83 : f32 to vector<8x1xf32>
      %180 = arith.divf %178, %179 : vector<8x1xf32>
      %181 = arith.mulf %175, %175 : vector<8x1xf32>
      %182 = arith.subf %180, %181 : vector<8x1xf32>
      %183 = vector.broadcast %175 : vector<8x1xf32> to vector<8x32xf32>
      %184 = arith.subf %169, %183 : vector<8x32xf32>
      %cst_84 = arith.constant 9.99999996E-13 : f32
      %185 = vector.broadcast %cst_84 : f32 to vector<8x1xf32>
      %186 = arith.addf %182, %185 : vector<8x1xf32>
      %187 = math.rsqrt %186 : vector<8x1xf32>
      %188 = vector.broadcast %187 : vector<8x1xf32> to vector<8x32xf32>
      %189 = arith.mulf %184, %188 : vector<8x32xf32>
      %190 = vector.broadcast %170 : vector<1x32xf32> to vector<8x32xf32>
      %191 = arith.mulf %189, %190 : vector<8x32xf32>
      %192 = vector.broadcast %171 : vector<1x32xf32> to vector<8x32xf32>
      %193 = arith.addf %191, %192 : vector<8x32xf32>
      %c0_85 = arith.constant 0 : index
      %c0_86 = arith.constant 0 : index
      %194 = vector.load %arg23[%c0_85, %c0_86] : memref<8x32xf32, #tpu.memory_space<vmem>>, vector<8x32xf32>
      tpu.vector_store %arg23[%c0_85, %c0_86], %193 {strides = array<i32>} : memref<8x32xf32, #tpu.memory_space<vmem>>, vector<8x32xf32>,
    } else {
    }
    %c0 = arith.constant 0 : index
    %c0_1 = arith.constant 0 : index
    %3 = vector.load %arg23[%c0, %c0_1] : memref<8x32xf32, #tpu.memory_space<vmem>>, vector<8x32xf32>
    %4 = arith.truncf %3 : vector<8x32xf32> to vector<8x32xbf16>
    %c0_2 = arith.constant 0 : index
    %c0_3 = arith.constant 0 : index
    %c0_4 = arith.constant 0 : index
    %5 = vector.load %arg6[%c0_2, %c0_3, %c0_4] : memref<1x32x96xbf16, #tpu.memory_space<vmem>>, vector<1x32x96xbf16>
    %6 = vector.shape_cast %5 : vector<1x32x96xbf16> to vector<32x96xbf16>
    %cst = arith.constant dense<0.000000e+00> : vector<8x96xf32>
    %7 = tpu.matmul %4, %6, %cst {dimension_numbers = #tpu.dot_dimension_numbers<[1], [0], [0], [1], [0, 0, 1, 1], [], []>} : vector<8x32xbf16>, vector<32x96xbf16>, vector<8x96xf32> -> vector<8x96xf32>
    %c0_5 = arith.constant 0 : index
    %c0_6 = arith.constant 0 : index
    %c0_7 = arith.constant 0 : index
    %8 = vector.load %arg7[%c0_5, %c0_6, %c0_7] : memref<1x1x96xf32, #tpu.memory_space<vmem>>, vector<1x1x96xf32>
    %9 = vector.shape_cast %8 : vector<1x1x96xf32> to vector<1x96xf32>
    %10 = vector.broadcast %9 : vector<1x96xf32> to vector<8x96xf32>
    %11 = arith.addf %7, %10 : vector<8x96xf32>
    %12 = vector.extract_strided_slice %11 {offsets = [0, 0], sizes = [8, 8], strides = [1, 1]} : vector<8x96xf32> to vector<8x8xf32>
    %13 = vector.extract_strided_slice %11 {offsets = [0, 8], sizes = [8, 8], strides = [1, 1]} : vector<8x96xf32> to vector<8x8xf32>
    %14 = vector.extract_strided_slice %11 {offsets = [0, 16], sizes = [8, 8], strides = [1, 1]} : vector<8x96xf32> to vector<8x8xf32>
    %15 = vector.extract_strided_slice %11 {offsets = [0, 24], sizes = [8, 8], strides = [1, 1]} : vector<8x96xf32> to vector<8x8xf32>
    %16 = vector.shape_cast %12 : vector<8x8xf32> to vector<1x8x8xf32>
    %17 = vector.shape_cast %13 : vector<8x8xf32> to vector<1x8x8xf32>
    %18 = vector.shape_cast %14 : vector<8x8xf32> to vector<1x8x8xf32>
    %19 = vector.shape_cast %15 : vector<8x8xf32> to vector<1x8x8xf32>
    %20 = tpu.concatenate %16, %17, %18, %19 in 0 : vector<1x8x8xf32>, vector<1x8x8xf32>, vector<1x8x8xf32>, vector<1x8x8xf32> -> vector<4x8x8xf32>
    %21 = vector.extract_strided_slice %11 {offsets = [0, 32], sizes = [8, 8], strides = [1, 1]} : vector<8x96xf32> to vector<8x8xf32>
    %22 = vector.extract_strided_slice %11 {offsets = [0, 40], sizes = [8, 8], strides = [1, 1]} : vector<8x96xf32> to vector<8x8xf32>
    %23 = vector.extract_strided_slice %11 {offsets = [0, 48], sizes = [8, 8], strides = [1, 1]} : vector<8x96xf32> to vector<8x8xf32>
    %24 = vector.extract_strided_slice %11 {offsets = [0, 56], sizes = [8, 8], strides = [1, 1]} : vector<8x96xf32> to vector<8x8xf32>
    %25 = vector.shape_cast %21 : vector<8x8xf32> to vector<1x8x8xf32>
    %26 = vector.shape_cast %22 : vector<8x8xf32> to vector<1x8x8xf32>
    %27 = vector.shape_cast %23 : vector<8x8xf32> to vector<1x8x8xf32>
    %28 = vector.shape_cast %24 : vector<8x8xf32> to vector<1x8x8xf32>
    %29 = tpu.concatenate %25, %26, %27, %28 in 0 : vector<1x8x8xf32>, vector<1x8x8xf32>, vector<1x8x8xf32>, vector<1x8x8xf32> -> vector<4x8x8xf32>
    %30 = vector.extract_strided_slice %11 {offsets = [0, 64], sizes = [8, 8], strides = [1, 1]} : vector<8x96xf32> to vector<8x8xf32>
    %31 = vector.extract_strided_slice %11 {offsets = [0, 72], sizes = [8, 8], strides = [1, 1]} : vector<8x96xf32> to vector<8x8xf32>
    %32 = vector.extract_strided_slice %11 {offsets = [0, 80], sizes = [8, 8], strides = [1, 1]} : vector<8x96xf32> to vector<8x8xf32>
    %33 = vector.extract_strided_slice %11 {offsets = [0, 88], sizes = [8, 8], strides = [1, 1]} : vector<8x96xf32> to vector<8x8xf32>
    %34 = vector.shape_cast %30 : vector<8x8xf32> to vector<1x8x8xf32>
    %35 = vector.shape_cast %31 : vector<8x8xf32> to vector<1x8x8xf32>
    %36 = vector.shape_cast %32 : vector<8x8xf32> to vector<1x8x8xf32>
    %37 = vector.shape_cast %33 : vector<8x8xf32> to vector<1x8x8xf32>
    %38 = tpu.concatenate %34, %35, %36, %37 in 0 : vector<1x8x8xf32>, vector<1x8x8xf32>, vector<1x8x8xf32>, vector<1x8x8xf32> -> vector<4x8x8xf32>
    %cst_8 = arith.constant dense<0.000000e+00> : vector<4x8x8xf32>
    %39 = tpu.matmul %20, %29, %cst_8 {dimension_numbers = #tpu.dot_dimension_numbers<[2], [2], [1], [1], [0, 0, 0, 1, 1, 1], [0], [0]>} : vector<4x8x8xf32>, vector<4x8x8xf32>, vector<4x8x8xf32> -> vector<4x8x8xf32>
    %cst_9 = arith.constant 0.353553385 : f32
    %40 = vector.broadcast %cst_9 : f32 to vector<4x8x8xf32>
    %41 = arith.mulf %39, %40 : vector<4x8x8xf32>
    %c0_10 = arith.constant 0 : index
    %c0_11 = arith.constant 0 : index
    %c0_12 = arith.constant 0 : index
    %42 = vector.load %arg3[%c0_10, %c0_11, %c0_12] : memref<1x1x8xf32, #tpu.memory_space<vmem>>, vector<1x1x8xf32>
    %43 = vector.shape_cast %42 : vector<1x1x8xf32> to vector<1x8xf32>
    %44 = vector.shape_cast %43 : vector<1x8xf32> to vector<1x1x8xf32>
    %45 = vector.broadcast %44 : vector<1x1x8xf32> to vector<4x8x8xf32>
    %46 = arith.addf %41, %45 : vector<4x8x8xf32>
    %cst_13 = arith.constant dense<0xFF800000> : vector<4x8xf32>
    %47 = vector.multi_reduction <maximumf>, %46, %cst_13 [2] : vector<4x8x8xf32> to vector<4x8xf32>
    %48 = vector.shape_cast %47 : vector<4x8xf32> to vector<4x8x1xf32>
    %49 = vector.broadcast %48 : vector<4x8x1xf32> to vector<4x8x8xf32>
    %50 = arith.subf %46, %49 : vector<4x8x8xf32>
    %51 = math.exp %50 : vector<4x8x8xf32>
    %cst_14 = arith.constant dense<0.000000e+00> : vector<4x8xf32>
    %52 = vector.multi_reduction <add>, %51, %cst_14 [2] : vector<4x8x8xf32> to vector<4x8xf32>
    %53 = vector.shape_cast %52 : vector<4x8xf32> to vector<4x8x1xf32>
    %54 = tpu.reciprocal %53 {approx = true} : vector<4x8x1xf32> -> vector<4x8x1xf32>
    %55 = vector.broadcast %54 : vector<4x8x1xf32> to vector<4x8x8xf32>
    %56 = arith.mulf %51, %55 : vector<4x8x8xf32>
    %57 = arith.truncf %56 : vector<4x8x8xf32> to vector<4x8x8xbf16>
    %58 = arith.truncf %38 : vector<4x8x8xf32> to vector<4x8x8xbf16>
    %cst_15 = arith.constant dense<0.000000e+00> : vector<4x8x8xf32>
    %59 = tpu.matmul %57, %58, %cst_15 {dimension_numbers = #tpu.dot_dimension_numbers<[2], [1], [1], [2], [0, 0, 0, 1, 1, 2], [0], [0]>} : vector<4x8x8xbf16>, vector<4x8x8xbf16>, vector<4x8x8xf32> -> vector<4x8x8xf32>
    %60 = vector.extract_strided_slice %59 {offsets = [0, 0, 0], sizes = [1, 8, 8], strides = [1, 1, 1]} : vector<4x8x8xf32> to vector<1x8x8xf32>
    %61 = vector.shape_cast %60 : vector<1x8x8xf32> to vector<8x8xf32>
    %c0_16 = arith.constant 0 : index
    %c0_17 = arith.constant 0 : index
    %62 = vector.load %arg24[%c0_16, %c0_17] : memref<8x32xf32, #tpu.memory_space<vmem>>, vector<8x8xf32>
    tpu.vector_store %arg24[%c0_16, %c0_17], %61 {strides = array<i32>} : memref<8x32xf32, #tpu.memory_space<vmem>>, vector<8x8xf32>,
    %63 = vector.extract_strided_slice %59 {offsets = [1, 0, 0], sizes = [1, 8, 8], strides = [1, 1, 1]} : vector<4x8x8xf32> to vector<1x8x8xf32>
    %64 = vector.shape_cast %63 : vector<1x8x8xf32> to vector<8x8xf32>
    %c0_18 = arith.constant 0 : index
    %c8 = arith.constant 8 : index
    %65 = vector.load %arg24[%c0_18, %c8] : memref<8x32xf32, #tpu.memory_space<vmem>>, vector<8x8xf32>
    tpu.vector_store %arg24[%c0_18, %c8], %64 {strides = array<i32>} : memref<8x32xf32, #tpu.memory_space<vmem>>, vector<8x8xf32>,
    %66 = vector.extract_strided_slice %59 {offsets = [2, 0, 0], sizes = [1, 8, 8], strides = [1, 1, 1]} : vector<4x8x8xf32> to vector<1x8x8xf32>
    %67 = vector.shape_cast %66 : vector<1x8x8xf32> to vector<8x8xf32>
    %c0_19 = arith.constant 0 : index
    %c16 = arith.constant 16 : index
    %68 = vector.load %arg24[%c0_19, %c16] : memref<8x32xf32, #tpu.memory_space<vmem>>, vector<8x8xf32>
    tpu.vector_store %arg24[%c0_19, %c16], %67 {strides = array<i32>} : memref<8x32xf32, #tpu.memory_space<vmem>>, vector<8x8xf32>,
    %69 = vector.extract_strided_slice %59 {offsets = [3, 0, 0], sizes = [1, 8, 8], strides = [1, 1, 1]} : vector<4x8x8xf32> to vector<1x8x8xf32>
    %70 = vector.shape_cast %69 : vector<1x8x8xf32> to vector<8x8xf32>
    %c0_20 = arith.constant 0 : index
    %c24 = arith.constant 24 : index
    %71 = vector.load %arg24[%c0_20, %c24] : memref<8x32xf32, #tpu.memory_space<vmem>>, vector<8x8xf32>
    tpu.vector_store %arg24[%c0_20, %c24], %70 {strides = array<i32>} : memref<8x32xf32, #tpu.memory_space<vmem>>, vector<8x8xf32>,
    %c0_21 = arith.constant 0 : index
    %c0_22 = arith.constant 0 : index
    %72 = vector.load %arg24[%c0_21, %c0_22] : memref<8x32xf32, #tpu.memory_space<vmem>>, vector<8x32xf32>
    %73 = arith.truncf %72 : vector<8x32xf32> to vector<8x32xbf16>
    %c0_23 = arith.constant 0 : index
    %c0_24 = arith.constant 0 : index
    %c0_25 = arith.constant 0 : index
    %74 = vector.load %arg8[%c0_23, %c0_24, %c0_25] : memref<1x32x32xbf16, #tpu.memory_space<vmem>>, vector<1x32x32xbf16>
    %75 = vector.shape_cast %74 : vector<1x32x32xbf16> to vector<32x32xbf16>
    %cst_26 = arith.constant dense<0.000000e+00> : vector<8x32xf32>
    %76 = tpu.matmul %73, %75, %cst_26 {dimension_numbers = #tpu.dot_dimension_numbers<[1], [0], [0], [1], [0, 0, 1, 1], [], []>} : vector<8x32xbf16>, vector<32x32xbf16>, vector<8x32xf32> -> vector<8x32xf32>
    %c0_27 = arith.constant 0 : index
    %c0_28 = arith.constant 0 : index
    %c0_29 = arith.constant 0 : index
    %77 = vector.load %arg9[%c0_27, %c0_28, %c0_29] : memref<1x1x32xf32, #tpu.memory_space<vmem>>, vector<1x1x32xf32>
    %78 = vector.shape_cast %77 : vector<1x1x32xf32> to vector<1x32xf32>
    %79 = vector.broadcast %78 : vector<1x32xf32> to vector<8x32xf32>
    %80 = arith.addf %76, %79 : vector<8x32xf32>
    %81 = arith.addf %3, %80 : vector<8x32xf32>
    %c0_30 = arith.constant 0 : index
    %c0_31 = arith.constant 0 : index
    %c0_32 = arith.constant 0 : index
    %82 = vector.load %arg10[%c0_30, %c0_31, %c0_32] : memref<1x1x32xf32, #tpu.memory_space<vmem>>, vector<1x1x32xf32>
    %83 = vector.shape_cast %82 : vector<1x1x32xf32> to vector<1x32xf32>
    %c0_33 = arith.constant 0 : index
    %c0_34 = arith.constant 0 : index
    %c0_35 = arith.constant 0 : index
    %84 = vector.load %arg11[%c0_33, %c0_34, %c0_35] : memref<1x1x32xf32, #tpu.memory_space<vmem>>, vector<1x1x32xf32>
    %85 = vector.shape_cast %84 : vector<1x1x32xf32> to vector<1x32xf32>
    %cst_36 = arith.constant dense<0.000000e+00> : vector<8xf32>
    %86 = vector.multi_reduction <add>, %81, %cst_36 [1] : vector<8x32xf32> to vector<8xf32>
    %87 = vector.shape_cast %86 : vector<8xf32> to vector<8x1xf32>
    %cst_37 = arith.constant 3.200000e+01 : f32
    %88 = vector.broadcast %cst_37 : f32 to vector<8x1xf32>
    %89 = arith.divf %87, %88 : vector<8x1xf32>
    %90 = arith.mulf %81, %81 : vector<8x32xf32>
    %cst_38 = arith.constant dense<0.000000e+00> : vector<8xf32>
    %91 = vector.multi_reduction <add>, %90, %cst_38 [1] : vector<8x32xf32> to vector<8xf32>
    %92 = vector.shape_cast %91 : vector<8xf32> to vector<8x1xf32>
    %cst_39 = arith.constant 3.200000e+01 : f32
    %93 = vector.broadcast %cst_39 : f32 to vector<8x1xf32>
    %94 = arith.divf %92, %93 : vector<8x1xf32>
    %95 = arith.mulf %89, %89 : vector<8x1xf32>
    %96 = arith.subf %94, %95 : vector<8x1xf32>
    %97 = vector.broadcast %89 : vector<8x1xf32> to vector<8x32xf32>
    %98 = arith.subf %81, %97 : vector<8x32xf32>
    %cst_40 = arith.constant 9.99999996E-13 : f32
    %99 = vector.broadcast %cst_40 : f32 to vector<8x1xf32>
    %100 = arith.addf %96, %99 : vector<8x1xf32>
    %101 = math.rsqrt %100 : vector<8x1xf32>
    %102 = vector.broadcast %101 : vector<8x1xf32> to vector<8x32xf32>
    %103 = arith.mulf %98, %102 : vector<8x32xf32>
    %104 = vector.broadcast %83 : vector<1x32xf32> to vector<8x32xf32>
    %105 = arith.mulf %103, %104 : vector<8x32xf32>
    %106 = vector.broadcast %85 : vector<1x32xf32> to vector<8x32xf32>
    %107 = arith.addf %105, %106 : vector<8x32xf32>
    %108 = arith.truncf %107 : vector<8x32xf32> to vector<8x32xbf16>
    %c0_41 = arith.constant 0 : index
    %c0_42 = arith.constant 0 : index
    %c0_43 = arith.constant 0 : index
    %109 = vector.load %arg12[%c0_41, %c0_42, %c0_43] : memref<1x32x64xbf16, #tpu.memory_space<vmem>>, vector<1x32x64xbf16>
    %110 = vector.shape_cast %109 : vector<1x32x64xbf16> to vector<32x64xbf16>
    %cst_44 = arith.constant dense<0.000000e+00> : vector<8x64xf32>
    %111 = tpu.matmul %108, %110, %cst_44 {dimension_numbers = #tpu.dot_dimension_numbers<[1], [0], [0], [1], [0, 0, 1, 1], [], []>} : vector<8x32xbf16>, vector<32x64xbf16>, vector<8x64xf32> -> vector<8x64xf32>
    %c0_45 = arith.constant 0 : index
    %c0_46 = arith.constant 0 : index
    %c0_47 = arith.constant 0 : index
    %112 = vector.load %arg13[%c0_45, %c0_46, %c0_47] : memref<1x1x64xf32, #tpu.memory_space<vmem>>, vector<1x1x64xf32>
    %113 = vector.shape_cast %112 : vector<1x1x64xf32> to vector<1x64xf32>
    %114 = vector.broadcast %113 : vector<1x64xf32> to vector<8x64xf32>
    %115 = arith.addf %111, %114 : vector<8x64xf32>
    %cst_48 = arith.constant 5.000000e-01 : f32
    %116 = vector.broadcast %cst_48 : f32 to vector<8x64xf32>
    %117 = arith.mulf %116, %115 : vector<8x64xf32>
    %cst_49 = arith.constant 4.471500e-02 : f32
    %118 = vector.broadcast %cst_49 : f32 to vector<8x64xf32>
    %119 = arith.mulf %118, %115 : vector<8x64xf32>
    %120 = arith.mulf %119, %115 : vector<8x64xf32>
    %121 = arith.mulf %120, %115 : vector<8x64xf32>
    %122 = arith.addf %115, %121 : vector<8x64xf32>
    %cst_50 = arith.constant 0.797884583 : f32
    %123 = vector.broadcast %cst_50 : f32 to vector<8x64xf32>
    %124 = arith.mulf %123, %122 : vector<8x64xf32>
    %125 = math.tanh %124 : vector<8x64xf32>
    %cst_51 = arith.constant 1.000000e+00 : f32
    %126 = vector.broadcast %cst_51 : f32 to vector<8x64xf32>
    %127 = arith.addf %126, %125 : vector<8x64xf32>
    %128 = arith.mulf %117, %127 : vector<8x64xf32>
    %129 = arith.truncf %128 : vector<8x64xf32> to vector<8x64xbf16>
    %c0_52 = arith.constant 0 : index
    %c0_53 = arith.constant 0 : index
    %c0_54 = arith.constant 0 : index
    %130 = vector.load %arg14[%c0_52, %c0_53, %c0_54] : memref<1x64x32xbf16, #tpu.memory_space<vmem>>, vector<1x64x32xbf16>
    %131 = vector.shape_cast %130 : vector<1x64x32xbf16> to vector<64x32xbf16>
    %cst_55 = arith.constant dense<0.000000e+00> : vector<8x32xf32>
    %132 = tpu.matmul %129, %131, %cst_55 {dimension_numbers = #tpu.dot_dimension_numbers<[1], [0], [0], [1], [0, 0, 1, 1], [], []>} : vector<8x64xbf16>, vector<64x32xbf16>, vector<8x32xf32> -> vector<8x32xf32>
    %c0_56 = arith.constant 0 : index
    %c0_57 = arith.constant 0 : index
    %c0_58 = arith.constant 0 : index
    %133 = vector.load %arg15[%c0_56, %c0_57, %c0_58] : memref<1x1x32xf32, #tpu.memory_space<vmem>>, vector<1x1x32xf32>
    %134 = vector.shape_cast %133 : vector<1x1x32xf32> to vector<1x32xf32>
    %135 = vector.broadcast %134 : vector<1x32xf32> to vector<8x32xf32>
    %136 = arith.addf %132, %135 : vector<8x32xf32>
    %137 = arith.addf %107, %136 : vector<8x32xf32>
    %c0_59 = arith.constant 0 : index
    %c0_60 = arith.constant 0 : index
    %c0_61 = arith.constant 0 : index
    %138 = vector.load %arg16[%c0_59, %c0_60, %c0_61] : memref<1x1x32xf32, #tpu.memory_space<vmem>>, vector<1x1x32xf32>
    %139 = vector.shape_cast %138 : vector<1x1x32xf32> to vector<1x32xf32>
    %c0_62 = arith.constant 0 : index
    %c0_63 = arith.constant 0 : index
    %c0_64 = arith.constant 0 : index
    %140 = vector.load %arg17[%c0_62, %c0_63, %c0_64] : memref<1x1x32xf32, #tpu.memory_space<vmem>>, vector<1x1x32xf32>
    %141 = vector.shape_cast %140 : vector<1x1x32xf32> to vector<1x32xf32>
    %cst_65 = arith.constant dense<0.000000e+00> : vector<8xf32>
    %142 = vector.multi_reduction <add>, %137, %cst_65 [1] : vector<8x32xf32> to vector<8xf32>
    %143 = vector.shape_cast %142 : vector<8xf32> to vector<8x1xf32>
    %cst_66 = arith.constant 3.200000e+01 : f32
    %144 = vector.broadcast %cst_66 : f32 to vector<8x1xf32>
    %145 = arith.divf %143, %144 : vector<8x1xf32>
    %146 = arith.mulf %137, %137 : vector<8x32xf32>
    %cst_67 = arith.constant dense<0.000000e+00> : vector<8xf32>
    %147 = vector.multi_reduction <add>, %146, %cst_67 [1] : vector<8x32xf32> to vector<8xf32>
    %148 = vector.shape_cast %147 : vector<8xf32> to vector<8x1xf32>
    %cst_68 = arith.constant 3.200000e+01 : f32
    %149 = vector.broadcast %cst_68 : f32 to vector<8x1xf32>
    %150 = arith.divf %148, %149 : vector<8x1xf32>
    %151 = arith.mulf %145, %145 : vector<8x1xf32>
    %152 = arith.subf %150, %151 : vector<8x1xf32>
    %153 = vector.broadcast %145 : vector<8x1xf32> to vector<8x32xf32>
    %154 = arith.subf %137, %153 : vector<8x32xf32>
    %cst_69 = arith.constant 9.99999996E-13 : f32
    %155 = vector.broadcast %cst_69 : f32 to vector<8x1xf32>
    %156 = arith.addf %152, %155 : vector<8x1xf32>
    %157 = math.rsqrt %156 : vector<8x1xf32>
    %158 = vector.broadcast %157 : vector<8x1xf32> to vector<8x32xf32>
    %159 = arith.mulf %154, %158 : vector<8x32xf32>
    %160 = vector.broadcast %139 : vector<1x32xf32> to vector<8x32xf32>
    %161 = arith.mulf %159, %160 : vector<8x32xf32>
    %162 = vector.broadcast %141 : vector<1x32xf32> to vector<8x32xf32>
    %163 = arith.addf %161, %162 : vector<8x32xf32>
    %c0_70 = arith.constant 0 : index
    %c0_71 = arith.constant 0 : index
    %164 = vector.load %arg23[%c0_70, %c0_71] : memref<8x32xf32, #tpu.memory_space<vmem>>, vector<8x32xf32>
    tpu.vector_store %arg23[%c0_70, %c0_71], %163 {strides = array<i32>} : memref<8x32xf32, #tpu.memory_space<vmem>>, vector<8x32xf32>,
    %c1_i32 = arith.constant 1 : i32
    %165 = arith.cmpi eq, %arg1, %c1_i32 : i32
    %166 = arith.extui %165 : i1 to i32
    %c0_i32_72 = arith.constant 0 : i32
    %167 = arith.cmpi ne, %166, %c0_i32_72 : i32
    scf.if %167 {
      %168 = vector.extract_strided_slice %163 {offsets = [0, 0], sizes = [1, 32], strides = [1, 1]} : vector<8x32xf32> to vector<1x32xf32>
      %169 = arith.truncf %168 : vector<1x32xf32> to vector<1x32xbf16>
      %c0_73 = arith.constant 0 : index
      %c0_74 = arith.constant 0 : index
      %170 = vector.load %arg18[%c0_73, %c0_74] : memref<32x32xbf16, #tpu.memory_space<vmem>>, vector<32x32xbf16>
      %cst_75 = arith.constant dense<0.000000e+00> : vector<1x32xf32>
      %171 = tpu.matmul %169, %170, %cst_75 {dimension_numbers = #tpu.dot_dimension_numbers<[1], [0], [0], [1], [0, 0, 1, 1], [], []>} : vector<1x32xbf16>, vector<32x32xbf16>, vector<1x32xf32> -> vector<1x32xf32>
      %c0_76 = arith.constant 0 : index
      %c0_77 = arith.constant 0 : index
      %172 = vector.load %arg19[%c0_76, %c0_77] : memref<1x32xf32, #tpu.memory_space<vmem>>, vector<1x32xf32>
      %173 = arith.addf %171, %172 : vector<1x32xf32>
      %174 = math.tanh %173 : vector<1x32xf32>
      %175 = arith.truncf %174 : vector<1x32xf32> to vector<1x32xbf16>
      %c0_78 = arith.constant 0 : index
      %c0_79 = arith.constant 0 : index
      %176 = vector.load %arg20[%c0_78, %c0_79] : memref<32x256xbf16, #tpu.memory_space<vmem>>, vector<32x256xbf16>
      %cst_80 = arith.constant dense<0.000000e+00> : vector<1x256xf32>
      %177 = tpu.matmul %175, %176, %cst_80 {dimension_numbers = #tpu.dot_dimension_numbers<[1], [0], [0], [1], [0, 0, 1, 1], [], []>} : vector<1x32xbf16>, vector<32x256xbf16>, vector<1x256xf32> -> vector<1x256xf32>
      %c0_81 = arith.constant 0 : index
      %c0_82 = arith.constant 0 : index
      %178 = vector.load %arg21[%c0_81, %c0_82] : memref<1x256xf32, #tpu.memory_space<vmem>>, vector<1x256xf32>
      %179 = arith.addf %177, %178 : vector<1x256xf32>
      %c0_83 = arith.constant 0 : index
      %c0_84 = arith.constant 0 : index
      %c0_85 = arith.constant 0 : index
      %180 = vector.load %arg22[%c0_83, %c0_84, %c0_85] : memref<1x1x256xf32, #tpu.memory_space<vmem>>, vector<1x1x256xf32>
      %181 = vector.shape_cast %180 : vector<1x1x256xf32> to vector<1x256xf32>
      %182 = vector.shape_cast %179 : vector<1x256xf32> to vector<1x1x256xf32>
      tpu.vector_store %arg22[%c0_83, %c0_84, %c0_85], %182 {strides = array<i32>} : memref<1x1x256xf32, #tpu.memory_space<vmem>>, vector<1x1x256xf32>,
    } else {
    }
    return
  }
  func.func @transform_0(%arg0: i32, %arg1: i32) -> (i32, i32, i32) {
    %c0_i32 = arith.constant 0 : i32
    %c0_i32_0 = arith.constant 0 : i32
    %c0_i32_1 = arith.constant 0 : i32
    return %arg0, %c0_i32, %c0_i32_0 : i32, i32, i32
  }
  func.func @transform_1(%arg0: i32, %arg1: i32) -> (i32, i32, i32) {
    %c0_i32 = arith.constant 0 : i32
    %c0_i32_0 = arith.constant 0 : i32
    %c0_i32_1 = arith.constant 0 : i32
    return %arg0, %c0_i32, %c0_i32_0 : i32, i32, i32
  }
  func.func @transform_2(%arg0: i32, %arg1: i32) -> (i32, i32) {
    %c0_i32 = arith.constant 0 : i32
    %c0_i32_0 = arith.constant 0 : i32
    %c0_i32_1 = arith.constant 0 : i32
    return %c0_i32, %c0_i32_0 : i32, i32
  }
  func.func @transform_3(%arg0: i32, %arg1: i32) -> (i32, i32) {
    %c0_i32 = arith.constant 0 : i32
    %c0_i32_0 = arith.constant 0 : i32
    %c0_i32_1 = arith.constant 0 : i32
    return %c0_i32, %c0_i32_0 : i32, i32
  }
  func.func @transform_4(%arg0: i32, %arg1: i32) -> (i32, i32, i32) {
    %c0_i32 = arith.constant 0 : i32
    %c0_i32_0 = arith.constant 0 : i32
    %c0_i32_1 = arith.constant 0 : i32
    return %arg1, %c0_i32, %c0_i32_0 : i32, i32, i32
  }
  func.func @transform_5(%arg0: i32, %arg1: i32) -> (i32, i32, i32) {
    %c0_i32 = arith.constant 0 : i32
    %c0_i32_0 = arith.constant 0 : i32
    %c0_i32_1 = arith.constant 0 : i32
    return %arg1, %c0_i32, %c0_i32_0 : i32, i32, i32
  }
  func.func @transform_6(%arg0: i32, %arg1: i32) -> (i32, i32, i32) {
    %c0_i32 = arith.constant 0 : i32
    %c0_i32_0 = arith.constant 0 : i32
    %c0_i32_1 = arith.constant 0 : i32
    return %arg1, %c0_i32, %c0_i32_0 : i32, i32, i32
  }
  func.func @transform_7(%arg0: i32, %arg1: i32) -> (i32, i32, i32) {
    %c0_i32 = arith.constant 0 : i32
    %c0_i32_0 = arith.constant 0 : i32
    %c0_i32_1 = arith.constant 0 : i32
    return %arg1, %c0_i32, %c0_i32_0 : i32, i32, i32
  }
  func.func @transform_8(%arg0: i32, %arg1: i32) -> (i32, i32, i32) {
    %c0_i32 = arith.constant 0 : i32
    %c0_i32_0 = arith.constant 0 : i32
    %c0_i32_1 = arith.constant 0 : i32
    return %arg1, %c0_i32, %c0_i32_0 : i32, i32, i32
  }
  func.func @transform_9(%arg0: i32, %arg1: i32) -> (i32, i32, i32) {
    %c0_i32 = arith.constant 0 : i32
    %c0_i32_0 = arith.constant 0 : i32
    %c0_i32_1 = arith.constant 0 : i32
    return %arg1, %c0_i32, %c0_i32_0 : i32, i32, i32
  }
  func.func @transform_10(%arg0: i32, %arg1: i32) -> (i32, i32, i32) {
    %c0_i32 = arith.constant 0 : i32
    %c0_i32_0 = arith.constant 0 : i32
    %c0_i32_1 = arith.constant 0 : i32
    return %arg1, %c0_i32, %c0_i32_0 : i32, i32, i32
  }
  func.func @transform_11(%arg0: i32, %arg1: i32) -> (i32, i32, i32) {
    %c0_i32 = arith.constant 0 : i32
    %c0_i32_0 = arith.constant 0 : i32
    %c0_i32_1 = arith.constant 0 : i32
    return %arg1, %c0_i32, %c0_i32_0 : i32, i32, i32
  }
  func.func @transform_12(%arg0: i32, %arg1: i32) -> (i32, i32, i32) {
    %c0_i32 = arith.constant 0 : i32
    %c0_i32_0 = arith.constant 0 : i32
    %c0_i32_1 = arith.constant 0 : i32
    return %arg1, %c0_i32, %c0_i32_0 : i32, i32, i32
  }
  func.func @transform_13(%arg0: i32, %arg1: i32) -> (i32, i32, i32) {
    %c0_i32 = arith.constant 0 : i32
    %c0_i32_0 = arith.constant 0 : i32
    %c0_i32_1 = arith.constant 0 : i32
    return %arg1, %c0_i32, %c0_i32_0 : i32, i32, i32
  }
  func.func @transform_14(%arg0: i32, %arg1: i32) -> (i32, i32, i32) {
    %c0_i32 = arith.constant 0 : i32
    %c0_i32_0 = arith.constant 0 : i32
    %c0_i32_1 = arith.constant 0 : i32
    return %arg1, %c0_i32, %c0_i32_0 : i32, i32, i32
  }
  func.func @transform_15(%arg0: i32, %arg1: i32) -> (i32, i32, i32) {
    %c0_i32 = arith.constant 0 : i32
    %c0_i32_0 = arith.constant 0 : i32
    %c0_i32_1 = arith.constant 0 : i32
    return %arg1, %c0_i32, %c0_i32_0 : i32, i32, i32
  }
  func.func @transform_16(%arg0: i32, %arg1: i32) -> (i32, i32) {
    %c0_i32 = arith.constant 0 : i32
    %c0_i32_0 = arith.constant 0 : i32
    %c0_i32_1 = arith.constant 0 : i32
    return %c0_i32, %c0_i32_0 : i32, i32
  }
  func.func @transform_17(%arg0: i32, %arg1: i32) -> (i32, i32) {
    %c0_i32 = arith.constant 0 : i32
    %c0_i32_0 = arith.constant 0 : i32
    %c0_i32_1 = arith.constant 0 : i32
    return %c0_i32, %c0_i32_0 : i32, i32
  }
  func.func @transform_18(%arg0: i32, %arg1: i32) -> (i32, i32) {
    %c0_i32 = arith.constant 0 : i32
    %c0_i32_0 = arith.constant 0 : i32
    %c0_i32_1 = arith.constant 0 : i32
    return %c0_i32, %c0_i32_0 : i32, i32
  }
  func.func @transform_19(%arg0: i32, %arg1: i32) -> (i32, i32) {
    %c0_i32 = arith.constant 0 : i32
    %c0_i32_0 = arith.constant 0 : i32
    %c0_i32_1 = arith.constant 0 : i32
    return %c0_i32, %c0_i32_0 : i32, i32
  }
  func.func @transform_20(%arg0: i32, %arg1: i32) -> (i32, i32, i32) {
    %c0_i32 = arith.constant 0 : i32
    %c0_i32_0 = arith.constant 0 : i32
    %c0_i32_1 = arith.constant 0 : i32
    return %arg0, %c0_i32, %c0_i32_0 : i32, i32, i32
  }
}

</mosaic_0001>

<llo_original>
// kernel: _lambda_.1
$region0: #{_lambda_.1}
  #allocation0 [shape = 'u32[]', space=smem, size = 0x4, offset = 0x4, fixed_abs, tag = 'smem constant byte address 0x4 - core index']
  #allocation1 [shape = 'u32[144,128]{1,0:T(1,128)}', space=vmem, size = 0x12000, scoped, tag = 'internal scratch']
  #allocation2 [shape = 'f32[8,32]{1,0:T(8,128)}', space=vmem, size = 0x1000, scoped, tag = 'scratch operand']
  #allocation3 [shape = 'f32[8,32]{1,0:T(8,128)}', space=vmem, size = 0x1000, scoped, tag = 'scratch operand']
  %s0 = inlined_call_operand.vmem [shape: f32[2,8,32], index: 0, kind: input, shape index: {}]
  %s1 = inlined_call_operand.vmem [shape: f32[2,1,8], index: 1, kind: input, shape index: {}]
  %s2 = inlined_call_operand.vmem [shape: f32[1,32], index: 2, kind: input, shape index: {}]
  %s3 = inlined_call_operand.vmem [shape: f32[1,32], index: 3, kind: input, shape index: {}]
  %s4 = inlined_call_operand.vmem [shape: bf16[2,32,96], index: 4, kind: input, shape index: {}]
  %s5 = inlined_call_operand.vmem [shape: f32[2,1,96], index: 5, kind: input, shape index: {}]
  %s6 = inlined_call_operand.vmem [shape: bf16[2,32,32], index: 6, kind: input, shape index: {}]
  %s7 = inlined_call_operand.vmem [shape: f32[2,1,32], index: 7, kind: input, shape index: {}]
  %s8 = inlined_call_operand.vmem [shape: f32[2,1,32], index: 8, kind: input, shape index: {}]
  %s9 = inlined_call_operand.vmem [shape: f32[2,1,32], index: 9, kind: input, shape index: {}]
  %s10 = inlined_call_operand.vmem [shape: bf16[2,32,64], index: 10, kind: input, shape index: {}]
  %s11 = inlined_call_operand.vmem [shape: f32[2,1,64], index: 11, kind: input, shape index: {}]
  %s12 = inlined_call_operand.vmem [shape: bf16[2,64,32], index: 12, kind: input, shape index: {}]
  %s13 = inlined_call_operand.vmem [shape: f32[2,1,32], index: 13, kind: input, shape index: {}]
  %s14 = inlined_call_operand.vmem [shape: f32[2,1,32], index: 14, kind: input, shape index: {}]
  %s15 = inlined_call_operand.vmem [shape: f32[2,1,32], index: 15, kind: input, shape index: {}]
  %s16 = inlined_call_operand.vmem [shape: bf16[32,32], index: 16, kind: input, shape index: {}]
  %s17 = inlined_call_operand.vmem [shape: f32[1,32], index: 17, kind: input, shape index: {}]
  %s18 = inlined_call_operand.vmem [shape: bf16[32,256], index: 18, kind: input, shape index: {}]
  %s19 = inlined_call_operand.vmem [shape: f32[1,256], index: 19, kind: input, shape index: {}]
  %s20 = inlined_call_operand.vmem [shape: f32[2,1,256], index: 20, kind: output, shape index: {}]
  %s21 = sld [smem:[#allocation0]]
  $region121: #{_lambda_.1} parent=0
    _
  %s23 = ssub.s32 1, %s21
  %s24 = scalar_select 0, %s23, %s21
  loop: start=0, step=1, limit=6
  $region2: #{_lambda_.1} parent=0 // loop_pre_header
    _
  $region3: #{_lambda_.1} parent=0 // loop_header
    %s26 = sphi 0, %s30
    %p27 = scmp.ge.s32.totalorder %s26, 6
    %s33 = sphi 0, %s45
    %s34 = sphi 0, %s41
    %s35 = sphi 0, %s33
    %s36 = sphi 0, %s34
    %s37 = sphi 0, %s35
    %s38 = sphi 0, %s36
    %s48 = sphi 0, %s50
    %s51 = sphi 0, %s48
    %s52 = sphi 0, %s51
    %s68 = sphi 0, %s52
    %s74 = sphi 0, %s76
    %s77 = sphi 0, %s74
    %s78 = sphi 0, %s77
    %s94 = sphi 0, %s78
    %s98 = sphi 0, %s98
    %s100 = sphi 0, %s98
    %s101 = sphi 0, %s100
    %s115 = sphi 0, %s101
    %s119 = sphi 0, %s119
    %s121 = sphi 0, %s119
    %s122 = sphi 0, %s121
    %s136 = sphi 0, %s122
    %s142 = sphi 0, %s144
    %s145 = sphi 0, %s142
    %s146 = sphi 0, %s145
    %s162 = sphi 0, %s146
    %s168 = sphi 0, %s170
    %s171 = sphi 0, %s168
    %s172 = sphi 0, %s171
    %s188 = sphi 0, %s172
    %s194 = sphi 0, %s196
    %s197 = sphi 0, %s194
    %s198 = sphi 0, %s197
    %s214 = sphi 0, %s198
    %s220 = sphi 0, %s222
    %s223 = sphi 0, %s220
    %s224 = sphi 0, %s223
    %s240 = sphi 0, %s224
    %s246 = sphi 0, %s248
    %s249 = sphi 0, %s246
    %s250 = sphi 0, %s249
    %s266 = sphi 0, %s250
    %s272 = sphi 0, %s274
    %s275 = sphi 0, %s272
    %s276 = sphi 0, %s275
    %s292 = sphi 0, %s276
    %s298 = sphi 0, %s300
    %s301 = sphi 0, %s298
    %s302 = sphi 0, %s301
    %s318 = sphi 0, %s302
    %s324 = sphi 0, %s326
    %s327 = sphi 0, %s324
    %s328 = sphi 0, %s327
    %s344 = sphi 0, %s328
    %s350 = sphi 0, %s352
    %s353 = sphi 0, %s350
    %s354 = sphi 0, %s353
    %s370 = sphi 0, %s354
    %s376 = sphi 0, %s378
    %s379 = sphi 0, %s376
    %s380 = sphi 0, %s379
    %s396 = sphi 0, %s380
    %s402 = sphi 0, %s404
    %s405 = sphi 0, %s402
    %s406 = sphi 0, %s405
    %s422 = sphi 0, %s406
    %s428 = sphi 0, %s430
    %s431 = sphi 0, %s428
    %s432 = sphi 0, %s431
    %s448 = sphi 0, %s432
    %s452 = sphi 0, %s452
    %s454 = sphi 0, %s452
    %s455 = sphi 0, %s454
    %s469 = sphi 0, %s455
    %s473 = sphi 0, %s473
    %s475 = sphi 0, %s473
    %s476 = sphi 0, %s475
    %s490 = sphi 0, %s476
    %s494 = sphi 0, %s494
    %s496 = sphi 0, %s494
    %s497 = sphi 0, %s496
    %s511 = sphi 0, %s497
    %s515 = sphi 0, %s515
    %s517 = sphi 0, %s515
    %s518 = sphi 0, %s517
    %s532 = sphi 0, %s518
    %s538 = sphi 0, %s540
    %s541 = sphi 0, %s538
    %s542 = sphi 0, %s541
    %s558 = sphi 0, %s542
  $region4: #{_lambda_.1} parent=0 // loop_header_branch
    %29 = sbr.rel (%p27) target = $region8
  $region5: #{_lambda_.1} parent=0 // loop_body
    %s31 = ssub.s32 %s26, 1
    %s32 = ssub.s32 %s26, 2
    %s39 = sadd.s32 1, %s34
    %p40 = scmp.ge.s32.totalorder %s39, 2
    %s41 = scalar_select %p40, 0, %s39
    %s42 = sadd.s32 1, %s33
    %s43 = scalar_select %p40, %s42, %s33
    %p44 = scmp.ge.s32.totalorder %s43, 2
    %s45 = scalar_select %p44, 0, %s43
    %s46 = ssub.s32 %s33, %s45
    %p47 = scmp.eq.s32.totalorder %s46, 0
    %s49 = sadd.s32 %s48, 1
    %s50 = scalar_select %p47, %s48, %s49
    %p53 = pneg %p47
    %p54 = scmp.eq.s32.totalorder %s26, 3
    %p55 = por %p53, %p54
    %p56 = scmp.ne.s32.totalorder %s48, %s51
    %p57 = scmp.eq.s32.totalorder %s26, 0
    %p58 = por %p56, %p57
    %p59 = scmp.ne.s32.totalorder %s48, %s51
    %p60 = scmp.eq.s32.totalorder %s31, 3
    %p61 = por %p59, %p60
    %p62 = scmp.ne.s32.totalorder %s51, %s52
    %p63 = scmp.eq.s32.totalorder %s31, 0
    %p64 = por %p62, %p63
    %p65 = scmp.ne.s32.totalorder %s51, %s52
    %p66 = scmp.eq.s32.totalorder %s32, 3
    %p67 = por %p65, %p66
    %p69 = scmp.ne.s32.totalorder %s52, %s68
    %p70 = scmp.eq.s32.totalorder %s32, 0
    %p71 = por %p69, %p70
    %s72 = ssub.s32 %s33, %s45
    %p73 = scmp.eq.s32.totalorder %s72, 0
    %s75 = sadd.s32 %s74, 1
    %s76 = scalar_select %p73, %s74, %s75
    %p79 = pneg %p73
    %p80 = scmp.eq.s32.totalorder %s26, 3
    %p81 = por %p79, %p80
    %p82 = scmp.ne.s32.totalorder %s74, %s77
    %p83 = scmp.eq.s32.totalorder %s26, 0
    %p84 = por %p82, %p83
    %p85 = scmp.ne.s32.totalorder %s74, %s77
    %p86 = scmp.eq.s32.totalorder %s31, 3
    %p87 = por %p85, %p86
    %p88 = scmp.ne.s32.totalorder %s77, %s78
    %p89 = scmp.eq.s32.totalorder %s31, 0
    %p90 = por %p88, %p89
    %p91 = scmp.ne.s32.totalorder %s77, %s78
    %p92 = scmp.eq.s32.totalorder %s32, 3
    %p93 = por %p91, %p92
    %p95 = scmp.ne.s32.totalorder %s78, %s94
    %p96 = scmp.eq.s32.totalorder %s32, 0
    %p97 = por %p95, %p96
    %s99 = sadd.s32 %s98, 1
    %p102 = scmp.eq.s32.totalorder %s26, 3
    %p103 = scmp.ne.s32.totalorder %s98, %s100
    %p104 = scmp.eq.s32.totalorder %s26, 0
    %p105 = por %p103, %p104
    %p106 = scmp.ne.s32.totalorder %s98, %s100
    %p107 = scmp.eq.s32.totalorder %s31, 3
    %p108 = por %p106, %p107
    %p109 = scmp.ne.s32.totalorder %s100, %s101
    %p110 = scmp.eq.s32.totalorder %s31, 0
    %p111 = por %p109, %p110
    %p112 = scmp.ne.s32.totalorder %s100, %s101
    %p113 = scmp.eq.s32.totalorder %s32, 3
    %p114 = por %p112, %p113
    %p116 = scmp.ne.s32.totalorder %s101, %s115
    %p117 = scmp.eq.s32.totalorder %s32, 0
    %p118 = por %p116, %p117
    %s120 = sadd.s32 %s119, 1
    %p123 = scmp.eq.s32.totalorder %s26, 3
    %p124 = scmp.ne.s32.totalorder %s119, %s121
    %p125 = scmp.eq.s32.totalorder %s26, 0
    %p126 = por %p124, %p125
    %p127 = scmp.ne.s32.totalorder %s119, %s121
    %p128 = scmp.eq.s32.totalorder %s31, 3
    %p129 = por %p127, %p128
    %p130 = scmp.ne.s32.totalorder %s121, %s122
    %p131 = scmp.eq.s32.totalorder %s31, 0
    %p132 = por %p130, %p131
    %p133 = scmp.ne.s32.totalorder %s121, %s122
    %p134 = scmp.eq.s32.totalorder %s32, 3
    %p135 = por %p133, %p134
    %p137 = scmp.ne.s32.totalorder %s122, %s136
    %p138 = scmp.eq.s32.totalorder %s32, 0
    %p139 = por %p137, %p138
    %s140 = ssub.s32 %s34, %s41
    %p141 = scmp.eq.s32.totalorder %s140, 0
    %s143 = sadd.s32 %s142, 1
    %s144 = scalar_select %p141, %s142, %s143
    %p147 = pneg %p141
    %p148 = scmp.eq.s32.totalorder %s26, 3
    %p149 = por %p147, %p148
    %p150 = scmp.ne.s32.totalorder %s142, %s145
    %p151 = scmp.eq.s32.totalorder %s26, 0
    %p152 = por %p150, %p151
    %p153 = scmp.ne.s32.totalorder %s142, %s145
    %p154 = scmp.eq.s32.totalorder %s31, 3
    %p155 = por %p153, %p154
    %p156 = scmp.ne.s32.totalorder %s145, %s146
    %p157 = scmp.eq.s32.totalorder %s31, 0
    %p158 = por %p156, %p157
    %p159 = scmp.ne.s32.totalorder %s145, %s146
    %p160 = scmp.eq.s32.totalorder %s32, 3
    %p161 = por %p159, %p160
    %p163 = scmp.ne.s32.totalorder %s146, %s162
    %p164 = scmp.eq.s32.totalorder %s32, 0
    %p165 = por %p163, %p164
    %s166 = ssub.s32 %s34, %s41
    %p167 = scmp.eq.s32.totalorder %s166, 0
    %s169 = sadd.s32 %s168, 1
    %s170 = scalar_select %p167, %s168, %s169
    %p173 = pneg %p167
    %p174 = scmp.eq.s32.totalorder %s26, 3
    %p175 = por %p173, %p174
    %p176 = scmp.ne.s32.totalorder %s168, %s171
    %p177 = scmp.eq.s32.totalorder %s26, 0
    %p178 = por %p176, %p177
    %p179 = scmp.ne.s32.totalorder %s168, %s171
    %p180 = scmp.eq.s32.totalorder %s31, 3
    %p181 = por %p179, %p180
    %p182 = scmp.ne.s32.totalorder %s171, %s172
    %p183 = scmp.eq.s32.totalorder %s31, 0
    %p184 = por %p182, %p183
    %p185 = scmp.ne.s32.totalorder %s171, %s172
    %p186 = scmp.eq.s32.totalorder %s32, 3
    %p187 = por %p185, %p186
    %p189 = scmp.ne.s32.totalorder %s172, %s188
    %p190 = scmp.eq.s32.totalorder %s32, 0
    %p191 = por %p189, %p190
    %s192 = ssub.s32 %s34, %s41
    %p193 = scmp.eq.s32.totalorder %s192, 0
    %s195 = sadd.s32 %s194, 1
    %s196 = scalar_select %p193, %s194, %s195
    %p199 = pneg %p193
    %p200 = scmp.eq.s32.totalorder %s26, 3
    %p201 = por %p199, %p200
    %p202 = scmp.ne.s32.totalorder %s194, %s197
    %p203 = scmp.eq.s32.totalorder %s26, 0
    %p204 = por %p202, %p203
    %p205 = scmp.ne.s32.totalorder %s194, %s197
    %p206 = scmp.eq.s32.totalorder %s31, 3
    %p207 = por %p205, %p206
    %p208 = scmp.ne.s32.totalorder %s197, %s198
    %p209 = scmp.eq.s32.totalorder %s31, 0
    %p210 = por %p208, %p209
    %p211 = scmp.ne.s32.totalorder %s197, %s198
    %p212 = scmp.eq.s32.totalorder %s32, 3
    %p213 = por %p211, %p212
    %p215 = scmp.ne.s32.totalorder %s198, %s214
    %p216 = scmp.eq.s32.totalorder %s32, 0
    %p217 = por %p215, %p216
    %s218 = ssub.s32 %s34, %s41
    %p219 = scmp.eq.s32.totalorder %s218, 0
    %s221 = sadd.s32 %s220, 1
    %s222 = scalar_select %p219, %s220, %s221
    %p225 = pneg %p219
    %p226 = scmp.eq.s32.totalorder %s26, 3
    %p227 = por %p225, %p226
    %p228 = scmp.ne.s32.totalorder %s220, %s223
    %p229 = scmp.eq.s32.totalorder %s26, 0
    %p230 = por %p228, %p229
    %p231 = scmp.ne.s32.totalorder %s220, %s223
    %p232 = scmp.eq.s32.totalorder %s31, 3
    %p233 = por %p231, %p232
    %p234 = scmp.ne.s32.totalorder %s223, %s224
    %p235 = scmp.eq.s32.totalorder %s31, 0
    %p236 = por %p234, %p235
    %p237 = scmp.ne.s32.totalorder %s223, %s224
    %p238 = scmp.eq.s32.totalorder %s32, 3
    %p239 = por %p237, %p238
    %p241 = scmp.ne.s32.totalorder %s224, %s240
    %p242 = scmp.eq.s32.totalorder %s32, 0
    %p243 = por %p241, %p242
    %s244 = ssub.s32 %s34, %s41
    %p245 = scmp.eq.s32.totalorder %s244, 0
    %s247 = sadd.s32 %s246, 1
    %s248 = scalar_select %p245, %s246, %s247
    %p251 = pneg %p245
    %p252 = scmp.eq.s32.totalorder %s26, 3
    %p253 = por %p251, %p252
    %p254 = scmp.ne.s32.totalorder %s246, %s249
    %p255 = scmp.eq.s32.totalorder %s26, 0
    %p256 = por %p254, %p255
    %p257 = scmp.ne.s32.totalorder %s246, %s249
    %p258 = scmp.eq.s32.totalorder %s31, 3
    %p259 = por %p257, %p258
    %p260 = scmp.ne.s32.totalorder %s249, %s250
    %p261 = scmp.eq.s32.totalorder %s31, 0
    %p262 = por %p260, %p261
    %p263 = scmp.ne.s32.totalorder %s249, %s250
    %p264 = scmp.eq.s32.totalorder %s32, 3
    %p265 = por %p263, %p264
    %p267 = scmp.ne.s32.totalorder %s250, %s266
    %p268 = scmp.eq.s32.totalorder %s32, 0
    %p269 = por %p267, %p268
    %s270 = ssub.s32 %s34, %s41
    %p271 = scmp.eq.s32.totalorder %s270, 0
    %s273 = sadd.s32 %s272, 1
    %s274 = scalar_select %p271, %s272, %s273
    %p277 = pneg %p271
    %p278 = scmp.eq.s32.totalorder %s26, 3
    %p279 = por %p277, %p278
    %p280 = scmp.ne.s32.totalorder %s272, %s275
    %p281 = scmp.eq.s32.totalorder %s26, 0
    %p282 = por %p280, %p281
    %p283 = scmp.ne.s32.totalorder %s272, %s275
    %p284 = scmp.eq.s32.totalorder %s31, 3
    %p285 = por %p283, %p284
    %p286 = scmp.ne.s32.totalorder %s275, %s276
    %p287 = scmp.eq.s32.totalorder %s31, 0
    %p288 = por %p286, %p287
    %p289 = scmp.ne.s32.totalorder %s275, %s276
    %p290 = scmp.eq.s32.totalorder %s32, 3
    %p291 = por %p289, %p290
    %p293 = scmp.ne.s32.totalorder %s276, %s292
    %p294 = scmp.eq.s32.totalorder %s32, 0
    %p295 = por %p293, %p294
    %s296 = ssub.s32 %s34, %s41
    %p297 = scmp.eq.s32.totalorder %s296, 0
    %s299 = sadd.s32 %s298, 1
    %s300 = scalar_select %p297, %s298, %s299
    %p303 = pneg %p297
    %p304 = scmp.eq.s32.totalorder %s26, 3
    %p305 = por %p303, %p304
    %p306 = scmp.ne.s32.totalorder %s298, %s301
    %p307 = scmp.eq.s32.totalorder %s26, 0
    %p308 = por %p306, %p307
    %p309 = scmp.ne.s32.totalorder %s298, %s301
    %p310 = scmp.eq.s32.totalorder %s31, 3
    %p311 = por %p309, %p310
    %p312 = scmp.ne.s32.totalorder %s301, %s302
    %p313 = scmp.eq.s32.totalorder %s31, 0
    %p314 = por %p312, %p313
    %p315 = scmp.ne.s32.totalorder %s301, %s302
    %p316 = scmp.eq.s32.totalorder %s32, 3
    %p317 = por %p315, %p316
    %p319 = scmp.ne.s32.totalorder %s302, %s318
    %p320 = scmp.eq.s32.totalorder %s32, 0
    %p321 = por %p319, %p320
    %s322 = ssub.s32 %s34, %s41
    %p323 = scmp.eq.s32.totalorder %s322, 0
    %s325 = sadd.s32 %s324, 1
    %s326 = scalar_select %p323, %s324, %s325
    %p329 = pneg %p323
    %p330 = scmp.eq.s32.totalorder %s26, 3
    %p331 = por %p329, %p330
    %p332 = scmp.ne.s32.totalorder %s324, %s327
    %p333 = scmp.eq.s32.totalorder %s26, 0
    %p334 = por %p332, %p333
    %p335 = scmp.ne.s32.totalorder %s324, %s327
    %p336 = scmp.eq.s32.totalorder %s31, 3
    %p337 = por %p335, %p336
    %p338 = scmp.ne.s32.totalorder %s327, %s328
    %p339 = scmp.eq.s32.totalorder %s31, 0
    %p340 = por %p338, %p339
    %p341 = scmp.ne.s32.totalorder %s327, %s328
    %p342 = scmp.eq.s32.totalorder %s32, 3
    %p343 = por %p341, %p342
    %p345 = scmp.ne.s32.totalorder %s328, %s344
    %p346 = scmp.eq.s32.totalorder %s32, 0
    %p347 = por %p345, %p346
    %s348 = ssub.s32 %s34, %s41
    %p349 = scmp.eq.s32.totalorder %s348, 0
    %s351 = sadd.s32 %s350, 1
    %s352 = scalar_select %p349, %s350, %s351
    %p355 = pneg %p349
    %p356 = scmp.eq.s32.totalorder %s26, 3
    %p357 = por %p355, %p356
    %p358 = scmp.ne.s32.totalorder %s350, %s353
    %p359 = scmp.eq.s32.totalorder %s26, 0
    %p360 = por %p358, %p359
    %p361 = scmp.ne.s32.totalorder %s350, %s353
    %p362 = scmp.eq.s32.totalorder %s31, 3
    %p363 = por %p361, %p362
    %p364 = scmp.ne.s32.totalorder %s353, %s354
    %p365 = scmp.eq.s32.totalorder %s31, 0
    %p366 = por %p364, %p365
    %p367 = scmp.ne.s32.totalorder %s353, %s354
    %p368 = scmp.eq.s32.totalorder %s32, 3
    %p369 = por %p367, %p368
    %p371 = scmp.ne.s32.totalorder %s354, %s370
    %p372 = scmp.eq.s32.totalorder %s32, 0
    %p373 = por %p371, %p372
    %s374 = ssub.s32 %s34, %s41
    %p375 = scmp.eq.s32.totalorder %s374, 0
    %s377 = sadd.s32 %s376, 1
    %s378 = scalar_select %p375, %s376, %s377
    %p381 = pneg %p375
    %p382 = scmp.eq.s32.totalorder %s26, 3
    %p383 = por %p381, %p382
    %p384 = scmp.ne.s32.totalorder %s376, %s379
    %p385 = scmp.eq.s32.totalorder %s26, 0
    %p386 = por %p384, %p385
    %p387 = scmp.ne.s32.totalorder %s376, %s379
    %p388 = scmp.eq.s32.totalorder %s31, 3
    %p389 = por %p387, %p388
    %p390 = scmp.ne.s32.totalorder %s379, %s380
    %p391 = scmp.eq.s32.totalorder %s31, 0
    %p392 = por %p390, %p391
    %p393 = scmp.ne.s32.totalorder %s379, %s380
    %p394 = scmp.eq.s32.totalorder %s32, 3
    %p395 = por %p393, %p394
    %p397 = scmp.ne.s32.totalorder %s380, %s396
    %p398 = scmp.eq.s32.totalorder %s32, 0
    %p399 = por %p397, %p398
    %s400 = ssub.s32 %s34, %s41
    %p401 = scmp.eq.s32.totalorder %s400, 0
    %s403 = sadd.s32 %s402, 1
    %s404 = scalar_select %p401, %s402, %s403
    %p407 = pneg %p401
    %p408 = scmp.eq.s32.totalorder %s26, 3
    %p409 = por %p407, %p408
    %p410 = scmp.ne.s32.totalorder %s402, %s405
    %p411 = scmp.eq.s32.totalorder %s26, 0
    %p412 = por %p410, %p411
    %p413 = scmp.ne.s32.totalorder %s402, %s405
    %p414 = scmp.eq.s32.totalorder %s31, 3
    %p415 = por %p413, %p414
    %p416 = scmp.ne.s32.totalorder %s405, %s406
    %p417 = scmp.eq.s32.totalorder %s31, 0
    %p418 = por %p416, %p417
    %p419 = scmp.ne.s32.totalorder %s405, %s406
    %p420 = scmp.eq.s32.totalorder %s32, 3
    %p421 = por %p419, %p420
    %p423 = scmp.ne.s32.totalorder %s406, %s422
    %p424 = scmp.eq.s32.totalorder %s32, 0
    %p425 = por %p423, %p424
    %s426 = ssub.s32 %s34, %s41
    %p427 = scmp.eq.s32.totalorder %s426, 0
    %s429 = sadd.s32 %s428, 1
    %s430 = scalar_select %p427, %s428, %s429
    %p433 = pneg %p427
    %p434 = scmp.eq.s32.totalorder %s26, 3
    %p435 = por %p433, %p434
    %p436 = scmp.ne.s32.totalorder %s428, %s431
    %p437 = scmp.eq.s32.totalorder %s26, 0
    %p438 = por %p436, %p437
    %p439 = scmp.ne.s32.totalorder %s428, %s431
    %p440 = scmp.eq.s32.totalorder %s31, 3
    %p441 = por %p439, %p440
    %p442 = scmp.ne.s32.totalorder %s431, %s432
    %p443 = scmp.eq.s32.totalorder %s31, 0
    %p444 = por %p442, %p443
    %p445 = scmp.ne.s32.totalorder %s431, %s432
    %p446 = scmp.eq.s32.totalorder %s32, 3
    %p447 = por %p445, %p446
    %p449 = scmp.ne.s32.totalorder %s432, %s448
    %p450 = scmp.eq.s32.totalorder %s32, 0
    %p451 = por %p449, %p450
    %s453 = sadd.s32 %s452, 1
    %p456 = scmp.eq.s32.totalorder %s26, 3
    %p457 = scmp.ne.s32.totalorder %s452, %s454
    %p458 = scmp.eq.s32.totalorder %s26, 0
    %p459 = por %p457, %p458
    %p460 = scmp.ne.s32.totalorder %s452, %s454
    %p461 = scmp.eq.s32.totalorder %s31, 3
    %p462 = por %p460, %p461
    %p463 = scmp.ne.s32.totalorder %s454, %s455
    %p464 = scmp.eq.s32.totalorder %s31, 0
    %p465 = por %p463, %p464
    %p466 = scmp.ne.s32.totalorder %s454, %s455
    %p467 = scmp.eq.s32.totalorder %s32, 3
    %p468 = por %p466, %p467
    %p470 = scmp.ne.s32.totalorder %s455, %s469
    %p471 = scmp.eq.s32.totalorder %s32, 0
    %p472 = por %p470, %p471
    %s474 = sadd.s32 %s473, 1
    %p477 = scmp.eq.s32.totalorder %s26, 3
    %p478 = scmp.ne.s32.totalorder %s473, %s475
    %p479 = scmp.eq.s32.totalorder %s26, 0
    %p480 = por %p478, %p479
    %p481 = scmp.ne.s32.totalorder %s473, %s475
    %p482 = scmp.eq.s32.totalorder %s31, 3
    %p483 = por %p481, %p482
    %p484 = scmp.ne.s32.totalorder %s475, %s476
    %p485 = scmp.eq.s32.totalorder %s31, 0
    %p486 = por %p484, %p485
    %p487 = scmp.ne.s32.totalorder %s475, %s476
    %p488 = scmp.eq.s32.totalorder %s32, 3
    %p489 = por %p487, %p488
    %p491 = scmp.ne.s32.totalorder %s476, %s490
    %p492 = scmp.eq.s32.totalorder %s32, 0
    %p493 = por %p491, %p492
    %s495 = sadd.s32 %s494, 1
    %p498 = scmp.eq.s32.totalorder %s26, 3
    %p499 = scmp.ne.s32.totalorder %s494, %s496
    %p500 = scmp.eq.s32.totalorder %s26, 0
    %p501 = por %p499, %p500
    %p502 = scmp.ne.s32.totalorder %s494, %s496
    %p503 = scmp.eq.s32.totalorder %s31, 3
    %p504 = por %p502, %p503
    %p505 = scmp.ne.s32.totalorder %s496, %s497
    %p506 = scmp.eq.s32.totalorder %s31, 0
    %p507 = por %p505, %p506
    %p508 = scmp.ne.s32.totalorder %s496, %s497
    %p509 = scmp.eq.s32.totalorder %s32, 3
    %p510 = por %p508, %p509
    %p512 = scmp.ne.s32.totalorder %s497, %s511
    %p513 = scmp.eq.s32.totalorder %s32, 0
    %p514 = por %p512, %p513
    %s516 = sadd.s32 %s515, 1
    %p519 = scmp.eq.s32.totalorder %s26, 3
    %p520 = scmp.ne.s32.totalorder %s515, %s517
    %p521 = scmp.eq.s32.totalorder %s26, 0
    %p522 = por %p520, %p521
    %p523 = scmp.ne.s32.totalorder %s515, %s517
    %p524 = scmp.eq.s32.totalorder %s31, 3
    %p525 = por %p523, %p524
    %p526 = scmp.ne.s32.totalorder %s517, %s518
    %p527 = scmp.eq.s32.totalorder %s31, 0
    %p528 = por %p526, %p527
    %p529 = scmp.ne.s32.totalorder %s517, %s518
    %p530 = scmp.eq.s32.totalorder %s32, 3
    %p531 = por %p529, %p530
    %p533 = scmp.ne.s32.totalorder %s518, %s532
    %p534 = scmp.eq.s32.totalorder %s32, 0
    %p535 = por %p533, %p534
    %s536 = ssub.s32 %s33, %s45
    %p537 = scmp.eq.s32.totalorder %s536, 0
    %s539 = sadd.s32 %s538, 1
    %s540 = scalar_select %p537, %s538, %s539
    %p543 = pneg %p537
    %p544 = scmp.eq.s32.totalorder %s26, 3
    %p545 = por %p543, %p544
    %p546 = scmp.ne.s32.totalorder %s538, %s541
    %p547 = scmp.eq.s32.totalorder %s26, 0
    %p548 = por %p546, %p547
    %p549 = scmp.ne.s32.totalorder %s538, %s541
    %p550 = scmp.eq.s32.totalorder %s31, 3
    %p551 = por %p549, %p550
    %p552 = scmp.ne.s32.totalorder %s541, %s542
    %p553 = scmp.eq.s32.totalorder %s31, 0
    %p554 = por %p552, %p553
    %p555 = scmp.ne.s32.totalorder %s541, %s542
    %p556 = scmp.eq.s32.totalorder %s32, 3
    %p557 = por %p555, %p556
    %p559 = scmp.ne.s32.totalorder %s542, %s558
    %p560 = scmp.eq.s32.totalorder %s32, 0
    %p561 = por %p559, %p560
    %p562 = scmp.le.s32.totalorder 1, %s26
    %p563 = scmp.lt.s32.totalorder %s26, 5
    %p564 = pnand %p562, %p563
    %p565 = pneg %p564
    // Predicated region
    $region9: #{_lambda_.1} parent=5 // pred_check
      _
    $region10: #{_lambda_.1} parent=5 // pred_check_branch
      %567 = sbr.rel (%p564) target = $region12
    $region11: #{_lambda_.1} parent=5 // pred_region
      %s568 = ssub.s32 %s26, 1
      // Predicated region
      $region13: #{_lambda_.1} parent=11 // pred_check
        %p569 = pneg %p111
      $region14: #{_lambda_.1} parent=11 // pred_check_branch
        %571 = sbr.rel (%p569) target = $region16
      $region15: #{_lambda_.1} parent=11 // pred_region
        _
      $region16: #{_lambda_.1} parent=11 // pred_fallthru
        _
      // Predicated region
      $region17: #{_lambda_.1} parent=11 // pred_check
        %p572 = pneg %p132
      $region18: #{_lambda_.1} parent=11 // pred_check_branch
        %574 = sbr.rel (%p572) target = $region20
      $region19: #{_lambda_.1} parent=11 // pred_region
        _
      $region20: #{_lambda_.1} parent=11 // pred_fallthru
        _
      // Predicated region
      $region21: #{_lambda_.1} parent=11 // pred_check
        %p575 = pneg %p465
      $region22: #{_lambda_.1} parent=11 // pred_check_branch
        %577 = sbr.rel (%p575) target = $region24
      $region23: #{_lambda_.1} parent=11 // pred_region
        _
      $region24: #{_lambda_.1} parent=11 // pred_fallthru
        _
      // Predicated region
      $region25: #{_lambda_.1} parent=11 // pred_check
        %p578 = pneg %p486
      $region26: #{_lambda_.1} parent=11 // pred_check_branch
        %580 = sbr.rel (%p578) target = $region28
      $region27: #{_lambda_.1} parent=11 // pred_region
        _
      $region28: #{_lambda_.1} parent=11 // pred_fallthru
        _
      // Predicated region
      $region29: #{_lambda_.1} parent=11 // pred_check
        %p581 = pneg %p507
      $region30: #{_lambda_.1} parent=11 // pred_check_branch
        %583 = sbr.rel (%p581) target = $region32
      $region31: #{_lambda_.1} parent=11 // pred_region
        _
      $region32: #{_lambda_.1} parent=11 // pred_fallthru
        _
      // Predicated region
      $region33: #{_lambda_.1} parent=11 // pred_check
        %p584 = pneg %p528
      $region34: #{_lambda_.1} parent=11 // pred_check_branch
        %586 = sbr.rel (%p584) target = $region36
      $region35: #{_lambda_.1} parent=11 // pred_region
        _
      $region36: #{_lambda_.1} parent=11 // pred_fallthru
        _
    $region12: #{_lambda_.1} parent=5 // pred_fallthru
      _
    %p587 = scmp.lt.s32.totalorder %s26, 4
    // Predicated region
    $region37: #{_lambda_.1} parent=5 // pred_check
      %p588 = pneg %p587
    $region38: #{_lambda_.1} parent=5 // pred_check_branch
      %590 = sbr.rel (%p588) target = $region40
    $region39: #{_lambda_.1} parent=5 // pred_region
      // Predicated region
      $region41: #{_lambda_.1} parent=39 // pred_check
        %p591 = pneg %p58
      $region42: #{_lambda_.1} parent=39 // pred_check_branch
        %593 = sbr.rel (%p591) target = $region44
      $region43: #{_lambda_.1} parent=39 // pred_region
        %p594 = scmp.lt.s32.totalorder %s33, 1
        %s595 = scalar_select %p594, %s33, 1
        %s596 = smul.addr %s595, 8
        %s597 = scalar_lea.vmem %s0, %s596
      $region44: #{_lambda_.1} parent=39 // pred_fallthru
        _
      // Predicated region
      $region45: #{_lambda_.1} parent=39 // pred_check
        %p598 = pneg %p84
      $region46: #{_lambda_.1} parent=39 // pred_check_branch
        %600 = sbr.rel (%p598) target = $region48
      $region47: #{_lambda_.1} parent=39 // pred_region
        %p601 = scmp.lt.s32.totalorder %s33, 1
        %s602 = scalar_select %p601, %s33, 1
        %s603 = scalar_lea.vmem %s1, %s602
      $region48: #{_lambda_.1} parent=39 // pred_fallthru
        _
      // Predicated region
      $region49: #{_lambda_.1} parent=39 // pred_check
        %p604 = pneg %p152
      $region50: #{_lambda_.1} parent=39 // pred_check_branch
        %606 = sbr.rel (%p604) target = $region52
      $region51: #{_lambda_.1} parent=39 // pred_region
        %p607 = scmp.lt.s32.totalorder %s34, 1
        %s608 = scalar_select %p607, %s34, 1
        %s609 = smul.addr %s608, 4
        %s610 = smul.addr %s609, 4
        %s611 = scalar_lea.vmem %s4, %s610
      $region52: #{_lambda_.1} parent=39 // pred_fallthru
        _
      // Predicated region
      $region53: #{_lambda_.1} parent=39 // pred_check
        %p612 = pneg %p178
      $region54: #{_lambda_.1} parent=39 // pred_check_branch
        %614 = sbr.rel (%p612) target = $region56
      $region55: #{_lambda_.1} parent=39 // pred_region
        %p615 = scmp.lt.s32.totalorder %s34, 1
        %s616 = scalar_select %p615, %s34, 1
        %s617 = scalar_lea.vmem %s5, %s616
      $region56: #{_lambda_.1} parent=39 // pred_fallthru
        _
      // Predicated region
      $region57: #{_lambda_.1} parent=39 // pred_check
        %p618 = pneg %p204
      $region58: #{_lambda_.1} parent=39 // pred_check_branch
        %620 = sbr.rel (%p618) target = $region60
      $region59: #{_lambda_.1} parent=39 // pred_region
        %p621 = scmp.lt.s32.totalorder %s34, 1
        %s622 = scalar_select %p621, %s34, 1
        %s623 = smul.addr %s622, 4
        %s624 = smul.addr %s623, 4
        %s625 = scalar_lea.vmem %s6, %s624
      $region60: #{_lambda_.1} parent=39 // pred_fallthru
        _
      // Predicated region
      $region61: #{_lambda_.1} parent=39 // pred_check
        %p626 = pneg %p230
      $region62: #{_lambda_.1} parent=39 // pred_check_branch
        %628 = sbr.rel (%p626) target = $region64
      $region63: #{_lambda_.1} parent=39 // pred_region
        %p629 = scmp.lt.s32.totalorder %s34, 1
        %s630 = scalar_select %p629, %s34, 1
        %s631 = scalar_lea.vmem %s7, %s630
      $region64: #{_lambda_.1} parent=39 // pred_fallthru
        _
      // Predicated region
      $region65: #{_lambda_.1} parent=39 // pred_check
        %p632 = pneg %p256
      $region66: #{_lambda_.1} parent=39 // pred_check_branch
        %634 = sbr.rel (%p632) target = $region68
      $region67: #{_lambda_.1} parent=39 // pred_region
        %p635 = scmp.lt.s32.totalorder %s34, 1
        %s636 = scalar_select %p635, %s34, 1
        %s637 = scalar_lea.vmem %s8, %s636
      $region68: #{_lambda_.1} parent=39 // pred_fallthru
        _
      // Predicated region
      $region69: #{_lambda_.1} parent=39 // pred_check
        %p638 = pneg %p282
      $region70: #{_lambda_.1} parent=39 // pred_check_branch
        %640 = sbr.rel (%p638) target = $region72
      $region71: #{_lambda_.1} parent=39 // pred_region
        %p641 = scmp.lt.s32.totalorder %s34, 1
        %s642 = scalar_select %p641, %s34, 1
        %s643 = scalar_lea.vmem %s9, %s642
      $region72: #{_lambda_.1} parent=39 // pred_fallthru
        _
      // Predicated region
      $region73: #{_lambda_.1} parent=39 // pred_check
        %p644 = pneg %p308
      $region74: #{_lambda_.1} parent=39 // pred_check_branch
        %646 = sbr.rel (%p644) target = $region76
      $region75: #{_lambda_.1} parent=39 // pred_region
        %p647 = scmp.lt.s32.totalorder %s34, 1
        %s648 = scalar_select %p647, %s34, 1
        %s649 = smul.addr %s648, 4
        %s650 = smul.addr %s649, 4
        %s651 = scalar_lea.vmem %s10, %s650
      $region76: #{_lambda_.1} parent=39 // pred_fallthru
        _
      // Predicated region
      $region77: #{_lambda_.1} parent=39 // pred_check
        %p652 = pneg %p334
      $region78: #{_lambda_.1} parent=39 // pred_check_branch
        %654 = sbr.rel (%p652) target = $region80
      $region79: #{_lambda_.1} parent=39 // pred_region
        %p655 = scmp.lt.s32.totalorder %s34, 1
        %s656 = scalar_select %p655, %s34, 1
        %s657 = scalar_lea.vmem %s11, %s656
      $region80: #{_lambda_.1} parent=39 // pred_fallthru
        _
      // Predicated region
      $region81: #{_lambda_.1} parent=39 // pred_check
        %p658 = pneg %p360
      $region82: #{_lambda_.1} parent=39 // pred_check_branch
        %660 = sbr.rel (%p658) target = $region84
      $region83: #{_lambda_.1} parent=39 // pred_region
        %p661 = scmp.lt.s32.totalorder %s34, 1
        %s662 = scalar_select %p661, %s34, 1
        %s663 = smul.addr %s662, 8
        %s664 = smul.addr %s663, 4
        %s665 = scalar_lea.vmem %s12, %s664
      $region84: #{_lambda_.1} parent=39 // pred_fallthru
        _
      // Predicated region
      $region85: #{_lambda_.1} parent=39 // pred_check
        %p666 = pneg %p386
      $region86: #{_lambda_.1} parent=39 // pred_check_branch
        %668 = sbr.rel (%p666) target = $region88
      $region87: #{_lambda_.1} parent=39 // pred_region
        %p669 = scmp.lt.s32.totalorder %s34, 1
        %s670 = scalar_select %p669, %s34, 1
        %s671 = scalar_lea.vmem %s13, %s670
      $region88: #{_lambda_.1} parent=39 // pred_fallthru
        _
      // Predicated region
      $region89: #{_lambda_.1} parent=39 // pred_check
        %p672 = pneg %p412
      $region90: #{_lambda_.1} parent=39 // pred_check_branch
        %674 = sbr.rel (%p672) target = $region92
      $region91: #{_lambda_.1} parent=39 // pred_region
        %p675 = scmp.lt.s32.totalorder %s34, 1
        %s676 = scalar_select %p675, %s34, 1
        %s677 = scalar_lea.vmem %s14, %s676
      $region92: #{_lambda_.1} parent=39 // pred_fallthru
        _
      // Predicated region
      $region93: #{_lambda_.1} parent=39 // pred_check
        %p678 = pneg %p438
      $region94: #{_lambda_.1} parent=39 // pred_check_branch
        %680 = sbr.rel (%p678) target = $region96
      $region95: #{_lambda_.1} parent=39 // pred_region
        %p681 = scmp.lt.s32.totalorder %s34, 1
        %s682 = scalar_select %p681, %s34, 1
        %s683 = scalar_lea.vmem %s15, %s682
      $region96: #{_lambda_.1} parent=39 // pred_fallthru
        _
    $region40: #{_lambda_.1} parent=5 // pred_fallthru
      _
    %p684 = scmp.le.s32.totalorder 1, %s26
    %p685 = scmp.lt.s32.totalorder %s26, 5
    %p686 = pnand %p684, %p685
    %p687 = pneg %p686
    // Predicated region
    $region97: #{_lambda_.1} parent=5 // pred_check
      _
    $region98: #{_lambda_.1} parent=5 // pred_check_branch
      %689 = sbr.rel (%p686) target = $region100
    $region99: #{_lambda_.1} parent=5 // pred_region
      %s690 = ssub.s32 %s26, 1
      %p691 = scmp.lt.s32.totalorder %s35, 1
      %s692 = scalar_select %p691, %s35, 1
      %s693 = smul.addr %s692, 8
      %s694 = scalar_lea.vmem %s0, %s693
      %p695 = pneg %p64
      %p696 = pneg %p61
      %p697 = scmp.lt.s32.totalorder %s35, 1
      %s698 = scalar_select %p697, %s35, 1
      %s699 = scalar_lea.vmem %s1, %s698
      %p700 = pneg %p90
      %p701 = pneg %p87
      %p702 = pneg %p111
      %p703 = pneg %p108
      %p704 = pneg %p132
      %p705 = pneg %p129
      %p706 = scmp.lt.s32.totalorder %s36, 1
      %s707 = scalar_select %p706, %s36, 1
      %s708 = smul.addr %s707, 4
      %s709 = smul.addr %s708, 4
      %s710 = scalar_lea.vmem %s4, %s709
      %p711 = pneg %p158
      %p712 = pneg %p155
      %p713 = scmp.lt.s32.totalorder %s36, 1
      %s714 = scalar_select %p713, %s36, 1
      %s715 = scalar_lea.vmem %s5, %s714
      %p716 = pneg %p184
      %p717 = pneg %p181
      %p718 = scmp.lt.s32.totalorder %s36, 1
      %s719 = scalar_select %p718, %s36, 1
      %s720 = smul.addr %s719, 4
      %s721 = smul.addr %s720, 4
      %s722 = scalar_lea.vmem %s6, %s721
      %p723 = pneg %p210
      %p724 = pneg %p207
      %p725 = scmp.lt.s32.totalorder %s36, 1
      %s726 = scalar_select %p725, %s36, 1
      %s727 = scalar_lea.vmem %s7, %s726
      %p728 = pneg %p236
      %p729 = pneg %p233
      %p730 = scmp.lt.s32.totalorder %s36, 1
      %s731 = scalar_select %p730, %s36, 1
      %s732 = scalar_lea.vmem %s8, %s731
      %p733 = pneg %p262
      %p734 = pneg %p259
      %p735 = scmp.lt.s32.totalorder %s36, 1
      %s736 = scalar_select %p735, %s36, 1
      %s737 = scalar_lea.vmem %s9, %s736
      %p738 = pneg %p288
      %p739 = pneg %p285
      %p740 = scmp.lt.s32.totalorder %s36, 1
      %s741 = scalar_select %p740, %s36, 1
      %s742 = smul.addr %s741, 4
      %s743 = smul.addr %s742, 4
      %s744 = scalar_lea.vmem %s10, %s743
      %p745 = pneg %p314
      %p746 = pneg %p311
      %p747 = scmp.lt.s32.totalorder %s36, 1
      %s748 = scalar_select %p747, %s36, 1
      %s749 = scalar_lea.vmem %s11, %s748
      %p750 = pneg %p340
      %p751 = pneg %p337
      %p752 = scmp.lt.s32.totalorder %s36, 1
      %s753 = scalar_select %p752, %s36, 1
      %s754 = smul.addr %s753, 8
      %s755 = smul.addr %s754, 4
      %s756 = scalar_lea.vmem %s12, %s755
      %p757 = pneg %p366
      %p758 = pneg %p363
      %p759 = scmp.lt.s32.totalorder %s36, 1
      %s760 = scalar_select %p759, %s36, 1
      %s761 = scalar_lea.vmem %s13, %s760
      %p762 = pneg %p392
      %p763 = pneg %p389
      %p764 = scmp.lt.s32.totalorder %s36, 1
      %s765 = scalar_select %p764, %s36, 1
      %s766 = scalar_lea.vmem %s14, %s765
      %p767 = pneg %p418
      %p768 = pneg %p415
      %p769 = scmp.lt.s32.totalorder %s36, 1
      %s770 = scalar_select %p769, %s36, 1
      %s771 = scalar_lea.vmem %s15, %s770
      %p772 = pneg %p444
      %p773 = pneg %p441
      %p774 = pneg %p465
      %p775 = pneg %p462
      %p776 = pneg %p486
      %p777 = pneg %p483
      %p778 = pneg %p507
      %p779 = pneg %p504
      %p780 = pneg %p528
      %p781 = pneg %p525
      %p782 = pneg %p554
      %p783 = pneg %p551
      %p784 = scmp.lt.s32.totalorder %s35, 1
      %s785 = scalar_select %p784, %s35, 1
      %s786 = smul.addr %s785, 2
      %s787 = scalar_lea.vmem %s20, %s786
      %p788 = scmp.lt.s32.totalorder %s35, 1
      %s789 = scalar_select %p788, %s35, 1
      %s790 = smul.addr %s789, 8
      %s791 = scalar_lea.vmem %s0, %s790
      %p792 = scmp.lt.s32.totalorder %s35, 1
      %s793 = scalar_select %p792, %s35, 1
      %s794 = scalar_lea.vmem %s1, %s793
      %p795 = scmp.lt.s32.totalorder %s36, 1
      %s796 = scalar_select %p795, %s36, 1
      %s797 = smul.addr %s796, 4
      %s798 = smul.addr %s797, 4
      %s799 = scalar_lea.vmem %s4, %s798
      %p800 = scmp.lt.s32.totalorder %s36, 1
      %s801 = scalar_select %p800, %s36, 1
      %s802 = scalar_lea.vmem %s5, %s801
      %p803 = scmp.lt.s32.totalorder %s36, 1
      %s804 = scalar_select %p803, %s36, 1
      %s805 = smul.addr %s804, 4
      %s806 = smul.addr %s805, 4
      %s807 = scalar_lea.vmem %s6, %s806
      %p808 = scmp.lt.s32.totalorder %s36, 1
      %s809 = scalar_select %p808, %s36, 1
      %s810 = scalar_lea.vmem %s7, %s809
      %p811 = scmp.lt.s32.totalorder %s36, 1
      %s812 = scalar_select %p811, %s36, 1
      %s813 = scalar_lea.vmem %s8, %s812
      %p814 = scmp.lt.s32.totalorder %s36, 1
      %s815 = scalar_select %p814, %s36, 1
      %s816 = scalar_lea.vmem %s9, %s815
      %p817 = scmp.lt.s32.totalorder %s36, 1
      %s818 = scalar_select %p817, %s36, 1
      %s819 = smul.addr %s818, 4
      %s820 = smul.addr %s819, 4
      %s821 = scalar_lea.vmem %s10, %s820
      %p822 = scmp.lt.s32.totalorder %s36, 1
      %s823 = scalar_select %p822, %s36, 1
      %s824 = scalar_lea.vmem %s11, %s823
      %p825 = scmp.lt.s32.totalorder %s36, 1
      %s826 = scalar_select %p825, %s36, 1
      %s827 = smul.addr %s826, 8
      %s828 = smul.addr %s827, 4
      %s829 = scalar_lea.vmem %s12, %s828
      %p830 = scmp.lt.s32.totalorder %s36, 1
      %s831 = scalar_select %p830, %s36, 1
      %s832 = scalar_lea.vmem %s13, %s831
      %p833 = scmp.lt.s32.totalorder %s36, 1
      %s834 = scalar_select %p833, %s36, 1
      %s835 = scalar_lea.vmem %s14, %s834
      %p836 = scmp.lt.s32.totalorder %s36, 1
      %s837 = scalar_select %p836, %s36, 1
      %s838 = scalar_lea.vmem %s15, %s837
      %p839 = scmp.lt.s32.totalorder %s35, 1
      %s840 = scalar_select %p839, %s35, 1
      %s841 = smul.addr %s840, 2
      %s842 = scalar_lea.vmem %s20, %s841
      %p844 = scmp.eq.s32.totalorder %s36, 0
      // Predicated region
      $region101: #{_lambda_.1} parent=99 // pred_check
        %p845 = pneg %p844
      $region102: #{_lambda_.1} parent=99 // pred_check_branch
        %847 = sbr.rel (%p845) target = $region104
      $region103: #{_lambda_.1} parent=99 // pred_region
        %v848 = vld [vmem:[%s791] sm:$0xff]
        %v849 = vld [vmem:[%s2] sm:$0x1]
        %v850 = vld [vmem:[%s3] sm:$0x1]
        %vm851 = vcmask 261120
        %v852 = vsel %vm851, %v848, 0.0
        %853 = vadd.xlane.f32.xlu0 %v852
        %v854 = vpop.xlane.xlu0 %853
        %v855 = vrcp.pop 32.0
        %v856 = vmul.f32 %v854, %v855
        %v857 = vmul.f32 %v848, %v848
        %v858 = vsel %vm851, %v857, 0.0
        %859 = vadd.xlane.f32.xlu0 %v858
        %v860 = vpop.xlane.xlu0 %859
        %v861 = vmul.f32 %v860, %v855
        %v862 = vmul.f32 %v856, %v856
        %v863 = vsub.f32 %v861, %v862
        %v864 = vsub.f32 %v848, %v856
        %v865 = vadd.f32 %v863, 1e-12
        %v866 = vrsqrt.pop %v865
        %v867 = vmul.f32 %v864, %v866
        %v869 = vlaneseq
        %v870 = vshrl.u32 %v869, 7
        %v871 = vsub.s32 0, %v870
        %v872 = vrot.slane %v849, %v871
        %v874 = vmul.f32 %v867, %v872
        %v876 = vlaneseq
        %v877 = vshrl.u32 %v876, 7
        %v878 = vsub.s32 0, %v877
        %v879 = vrot.slane %v850, %v878
        %v881 = vadd.f32 %v874, %v879
        %882 = vst.msk [vmem:[#allocation2] sm:$0xff] %vm851, %v881
      $region104: #{_lambda_.1} parent=99 // pred_fallthru
        _
      %v883 = vld [vmem:[#allocation2] sm:$0xff]
      %v884 = vpack.c.bf16 %v883, %v883
      %v885 = vld [vmem:[%s799] sm:$0xf]
      %v886 = vld [vmem:[%s799 + $0x4] sm:$0xf]
      %v887 = vld [vmem:[%s799 + $0x8] sm:$0xf]
      %v888 = vld [vmem:[%s799 + $0xc] sm:$0xf]
      %v889 = vld [vmem:[%s802] sm:$0x1]
      %v891 = vlaneseq
      %v892 = vshrl.u32 %v891, 7
      %v893 = vsub.s32 0, %v892
      %v894 = vrot.slane %v889, %v893
      %v900 = vunpack.c.l.b16 %v885
      %v901 = vunpack.c.l.b16 %v886
      %v902 = vunpack.c.l.b16 %v887
      %v903 = vunpack.c.l.b16 %v888
      %v904 = vpack.c.b16 %v901, %v900
      %v905 = vpack.c.b16 %v903, %v902
      %vm908 = vcmask 261120
      %v910 = vsel %vm908, %v884, 0
      %912 = vmatprep.subr.bf16.mxu0 0
      %913 = vmatpush1.bf16.msra.mxu0 %v904
      %914 = vmatprep.subr.bf16.mxu0 0
      %915 = vmatpush1.bf16.msra.mxu0 %v905
      %916 = vmatprep.subr.bf16.mxu0 0
      %917 = vmatpush1.bf16.msra.mxu0 0
      %918 = vmatprep.subr.bf16.mxu0 0
      %919 = vmatpush1.bf16.msra.mxu0 0
      %920 = vmatprep.subr.bf16.mxu0 0
      %921 = vmatpush1.bf16.msra.mxu0 0
      %922 = vmatprep.subr.bf16.mxu0 0
      %923 = vmatpush1.bf16.msra.mxu0 0
      %924 = vmatprep.subr.bf16.mxu0 0
      %925 = vmatpush1.bf16.msra.mxu0 0
      %926 = vmatprep.subr.bf16.mxu0 0
      %927 = vmatpush1.bf16.msra.mxu0 0
      %928 = vmatprep.subr.bf16.mxu0 0
      %929 = vmatpush1.bf16.msra.mxu0 0
      %930 = vmatprep.subr.bf16.mxu0 0
      %931 = vmatpush1.bf16.msra.mxu0 0
      %932 = vmatprep.subr.bf16.mxu0 0
      %933 = vmatpush1.bf16.msra.mxu0 0
      %934 = vmatprep.subr.bf16.mxu0 0
      %935 = vmatpush1.bf16.msra.mxu0 0
      %936 = vmatprep.subr.bf16.mxu0 0
      %937 = vmatpush1.bf16.msra.mxu0 0
      %938 = vmatprep.subr.bf16.mxu0 0
      %939 = vmatpush1.bf16.msra.mxu0 0
      %940 = vmatprep.subr.bf16.mxu0 0
      %941 = vmatpush1.bf16.msra.mxu0 0
      %942 = vmatprep.subr.bf16.mxu0 0
      %943 = vmatpush1.bf16.msra.mxu0 0
      %944 = vmatprep.mubr.bf16.mxu0 0
      %945 = vmatmul.mubr.bf16.gmra.mrb[0].mxu0 %v910
      %v946 = vpop.f32.mrb[0].mxu0
      %v947 = vadd.f32 %v894, %v946
      %v948 = vpop.f32.mrb[0].mxu0
      %v949 = vpop.f32.mrb[0].mxu0
      %v950 = vpop.f32.mrb[0].mxu0
      %951 = vdwg.mxu0
      %953 = vrot.lane.b32.xlu0 %v947, 120
      %v954 = vpop.permute.xlu0 %953
      %955 = vrot.lane.b32.xlu0 %v947, 112
      %v956 = vpop.permute.xlu0 %955
      %957 = vrot.lane.b32.xlu0 %v947, 104
      %v958 = vpop.permute.xlu0 %957
      %962 = vrot.lane.b32.xlu0 %v947, 96
      %v963 = vpop.permute.xlu0 %962
      %vm964 = vcmask 64512
      %v965 = vsel %vm964, %v947, 0
      %v967 = vsel %vm964, %v963, 0
      %969 = vmatprep.subr.mxu0 0.0
      %970 = vmatpush1.xpose.msra.mxu0 %v967
      %971 = vmatprep.subr.mxu0 0.0
      %972 = vmatpush1.xpose.msra.mxu0 0.0
      %973 = vmatprep.subr.mxu0 0.0
      %974 = vmatpush1.xpose.msra.mxu0 0.0
      %975 = vmatprep.subr.mxu0 0.0
      %976 = vmatpush1.xpose.msra.mxu0 0.0
      %977 = vmatprep.subr.mxu0 0.0
      %978 = vmatpush1.xpose.msra.mxu0 0.0
      %979 = vmatprep.subr.mxu0 0.0
      %980 = vmatpush1.xpose.msra.mxu0 0.0
      %981 = vmatprep.subr.mxu0 0.0
      %982 = vmatpush1.xpose.msra.mxu0 0.0
      %983 = vmatprep.subr.mxu0 0.0
      %984 = vmatpush1.xpose.msra.mxu0 0.0
      %985 = vmatprep.subr.mxu0 0.0
      %986 = vmatpush1.xpose.msra.mxu0 0.0
      %987 = vmatprep.subr.mxu0 0.0
      %988 = vmatpush1.xpose.msra.mxu0 0.0
      %989 = vmatprep.subr.mxu0 0.0
      %990 = vmatpush1.xpose.msra.mxu0 0.0
      %991 = vmatprep.subr.mxu0 0.0
      %992 = vmatpush1.xpose.msra.mxu0 0.0
      %993 = vmatprep.subr.mxu0 0.0
      %994 = vmatpush1.xpose.msra.mxu0 0.0
      %995 = vmatprep.subr.mxu0 0.0
      %996 = vmatpush1.xpose.msra.mxu0 0.0
      %997 = vmatprep.subr.mxu0 0.0
      %998 = vmatpush1.xpose.msra.mxu0 0.0
      %999 = vmatprep.subr.mxu0 0.0
      %1000 = vmatpush1.xpose.msra.mxu0 0.0
      %1001 = vmatprep.subr.mxu0 0.0
      %1002 = vmatpush1.xpose.msra.mxu0 0.0
      %1003 = vmatprep.subr.mxu0 0.0
      %1004 = vmatpush1.xpose.msra.mxu0 0.0
      %1005 = vmatprep.subr.mxu0 0.0
      %1006 = vmatpush1.xpose.msra.mxu0 0.0
      %1007 = vmatprep.subr.mxu0 0.0
      %1008 = vmatpush1.xpose.msra.mxu0 0.0
      %1009 = vmatprep.subr.mxu0 0.0
      %1010 = vmatpush1.xpose.msra.mxu0 0.0
      %1011 = vmatprep.subr.mxu0 0.0
      %1012 = vmatpush1.xpose.msra.mxu0 0.0
      %1013 = vmatprep.subr.mxu0 0.0
      %1014 = vmatpush1.xpose.msra.mxu0 0.0
      %1015 = vmatprep.subr.mxu0 0.0
      %1016 = vmatpush1.xpose.msra.mxu0 0.0
      %1017 = vmatprep.subr.mxu0 0.0
      %1018 = vmatpush1.xpose.msra.mxu0 0.0
      %1019 = vmatprep.subr.mxu0 0.0
      %1020 = vmatpush1.xpose.msra.mxu0 0.0
      %1021 = vmatprep.subr.mxu0 0.0
      %1022 = vmatpush1.xpose.msra.mxu0 0.0
      %1023 = vmatprep.subr.mxu0 0.0
      %1024 = vmatpush1.xpose.msra.mxu0 0.0
      %1025 = vmatprep.subr.mxu0 0.0
      %1026 = vmatpush1.xpose.msra.mxu0 0.0
      %1027 = vmatprep.subr.mxu0 0.0
      %1028 = vmatpush1.xpose.msra.mxu0 0.0
      %1029 = vmatprep.subr.mxu0 0.0
      %1030 = vmatpush1.xpose.msra.mxu0 0.0
      %1031 = vmatprep.subr.mxu0 0.0
      %1032 = vmatpush1.xpose.msra.mxu0 0.0
      %1033 = vmatprep.mubr.f32.mxu0 0.0
      %1034 = vmatmul.mubr.f32.gmra.mrb[0].mxu0 %v965
      %v1035 = vpop.f32.mrb[0].mxu0
      %v1036 = vadd.f32 0.0, %v1035
      %v1037 = vpop.f32.mrb[0].mxu0
      %1038 = vdwg.mxu0
      %1039 = vrot.lane.b32.xlu0 %v954, 96
      %v1040 = vpop.permute.xlu0 %1039
      %v1041 = vsel %vm964, %v954, 0
      %v1043 = vsel %vm964, %v1040, 0
      %1045 = vmatprep.subr.mxu0 0.0
      %1046 = vmatpush1.xpose.msra.mxu0 %v1043
      %1047 = vmatprep.subr.mxu0 0.0
      %1048 = vmatpush1.xpose.msra.mxu0 0.0
      %1049 = vmatprep.subr.mxu0 0.0
      %1050 = vmatpush1.xpose.msra.mxu0 0.0
      %1051 = vmatprep.subr.mxu0 0.0
      %1052 = vmatpush1.xpose.msra.mxu0 0.0
      %1053 = vmatprep.subr.mxu0 0.0
      %1054 = vmatpush1.xpose.msra.mxu0 0.0
      %1055 = vmatprep.subr.mxu0 0.0
      %1056 = vmatpush1.xpose.msra.mxu0 0.0
      %1057 = vmatprep.subr.mxu0 0.0
      %1058 = vmatpush1.xpose.msra.mxu0 0.0
      %1059 = vmatprep.subr.mxu0 0.0
      %1060 = vmatpush1.xpose.msra.mxu0 0.0
      %1061 = vmatprep.subr.mxu0 0.0
      %1062 = vmatpush1.xpose.msra.mxu0 0.0
      %1063 = vmatprep.subr.mxu0 0.0
      %1064 = vmatpush1.xpose.msra.mxu0 0.0
      %1065 = vmatprep.subr.mxu0 0.0
      %1066 = vmatpush1.xpose.msra.mxu0 0.0
      %1067 = vmatprep.subr.mxu0 0.0
      %1068 = vmatpush1.xpose.msra.mxu0 0.0
      %1069 = vmatprep.subr.mxu0 0.0
      %1070 = vmatpush1.xpose.msra.mxu0 0.0
      %1071 = vmatprep.subr.mxu0 0.0
      %1072 = vmatpush1.xpose.msra.mxu0 0.0
      %1073 = vmatprep.subr.mxu0 0.0
      %1074 = vmatpush1.xpose.msra.mxu0 0.0
      %1075 = vmatprep.subr.mxu0 0.0
      %1076 = vmatpush1.xpose.msra.mxu0 0.0
      %1077 = vmatprep.subr.mxu0 0.0
      %1078 = vmatpush1.xpose.msra.mxu0 0.0
      %1079 = vmatprep.subr.mxu0 0.0
      %1080 = vmatpush1.xpose.msra.mxu0 0.0
      %1081 = vmatprep.subr.mxu0 0.0
      %1082 = vmatpush1.xpose.msra.mxu0 0.0
      %1083 = vmatprep.subr.mxu0 0.0
      %1084 = vmatpush1.xpose.msra.mxu0 0.0
      %1085 = vmatprep.subr.mxu0 0.0
      %1086 = vmatpush1.xpose.msra.mxu0 0.0
      %1087 = vmatprep.subr.mxu0 0.0
      %1088 = vmatpush1.xpose.msra.mxu0 0.0
      %1089 = vmatprep.subr.mxu0 0.0
      %1090 = vmatpush1.xpose.msra.mxu0 0.0
      %1091 = vmatprep.subr.mxu0 0.0
      %1092 = vmatpush1.xpose.msra.mxu0 0.0
      %1093 = vmatprep.subr.mxu0 0.0
      %1094 = vmatpush1.xpose.msra.mxu0 0.0
      %1095 = vmatprep.subr.mxu0 0.0
      %1096 = vmatpush1.xpose.msra.mxu0 0.0
      %1097 = vmatprep.subr.mxu0 0.0
      %1098 = vmatpush1.xpose.msra.mxu0 0.0
      %1099 = vmatprep.subr.mxu0 0.0
      %1100 = vmatpush1.xpose.msra.mxu0 0.0
      %1101 = vmatprep.subr.mxu0 0.0
      %1102 = vmatpush1.xpose.msra.mxu0 0.0
      %1103 = vmatprep.subr.mxu0 0.0
      %1104 = vmatpush1.xpose.msra.mxu0 0.0
      %1105 = vmatprep.subr.mxu0 0.0
      %1106 = vmatpush1.xpose.msra.mxu0 0.0
      %1107 = vmatprep.subr.mxu0 0.0
      %1108 = vmatpush1.xpose.msra.mxu0 0.0
      %1109 = vmatprep.mubr.f32.mxu0 0.0
      %1110 = vmatmul.mubr.f32.gmra.mrb[0].mxu0 %v1041
      %v1111 = vpop.f32.mrb[0].mxu0
      %v1112 = vadd.f32 0.0, %v1111
      %v1113 = vpop.f32.mrb[0].mxu0
      %1114 = vdwg.mxu0
      %1115 = vrot.lane.b32.xlu0 %v956, 96
      %v1116 = vpop.permute.xlu0 %1115
      %v1117 = vsel %vm964, %v956, 0
      %v1119 = vsel %vm964, %v1116, 0
      %1121 = vmatprep.subr.mxu0 0.0
      %1122 = vmatpush1.xpose.msra.mxu0 %v1119
      %1123 = vmatprep.subr.mxu0 0.0
      %1124 = vmatpush1.xpose.msra.mxu0 0.0
      %1125 = vmatprep.subr.mxu0 0.0
      %1126 = vmatpush1.xpose.msra.mxu0 0.0
      %1127 = vmatprep.subr.mxu0 0.0
      %1128 = vmatpush1.xpose.msra.mxu0 0.0
      %1129 = vmatprep.subr.mxu0 0.0
      %1130 = vmatpush1.xpose.msra.mxu0 0.0
      %1131 = vmatprep.subr.mxu0 0.0
      %1132 = vmatpush1.xpose.msra.mxu0 0.0
      %1133 = vmatprep.subr.mxu0 0.0
      %1134 = vmatpush1.xpose.msra.mxu0 0.0
      %1135 = vmatprep.subr.mxu0 0.0
      %1136 = vmatpush1.xpose.msra.mxu0 0.0
      %1137 = vmatprep.subr.mxu0 0.0
      %1138 = vmatpush1.xpose.msra.mxu0 0.0
      %1139 = vmatprep.subr.mxu0 0.0
      %1140 = vmatpush1.xpose.msra.mxu0 0.0
      %1141 = vmatprep.subr.mxu0 0.0
      %1142 = vmatpush1.xpose.msra.mxu0 0.0
      %1143 = vmatprep.subr.mxu0 0.0
      %1144 = vmatpush1.xpose.msra.mxu0 0.0
      %1145 = vmatprep.subr.mxu0 0.0
      %1146 = vmatpush1.xpose.msra.mxu0 0.0
      %1147 = vmatprep.subr.mxu0 0.0
      %1148 = vmatpush1.xpose.msra.mxu0 0.0
      %1149 = vmatprep.subr.mxu0 0.0
      %1150 = vmatpush1.xpose.msra.mxu0 0.0
      %1151 = vmatprep.subr.mxu0 0.0
      %1152 = vmatpush1.xpose.msra.mxu0 0.0
      %1153 = vmatprep.subr.mxu0 0.0
      %1154 = vmatpush1.xpose.msra.mxu0 0.0
      %1155 = vmatprep.subr.mxu0 0.0
      %1156 = vmatpush1.xpose.msra.mxu0 0.0
      %1157 = vmatprep.subr.mxu0 0.0
      %1158 = vmatpush1.xpose.msra.mxu0 0.0
      %1159 = vmatprep.subr.mxu0 0.0
      %1160 = vmatpush1.xpose.msra.mxu0 0.0
      %1161 = vmatprep.subr.mxu0 0.0
      %1162 = vmatpush1.xpose.msra.mxu0 0.0
      %1163 = vmatprep.subr.mxu0 0.0
      %1164 = vmatpush1.xpose.msra.mxu0 0.0
      %1165 = vmatprep.subr.mxu0 0.0
      %1166 = vmatpush1.xpose.msra.mxu0 0.0
      %1167 = vmatprep.subr.mxu0 0.0
      %1168 = vmatpush1.xpose.msra.mxu0 0.0
      %1169 = vmatprep.subr.mxu0 0.0
      %1170 = vmatpush1.xpose.msra.mxu0 0.0
      %1171 = vmatprep.subr.mxu0 0.0
      %1172 = vmatpush1.xpose.msra.mxu0 0.0
      %1173 = vmatprep.subr.mxu0 0.0
      %1174 = vmatpush1.xpose.msra.mxu0 0.0
      %1175 = vmatprep.subr.mxu0 0.0
      %1176 = vmatpush1.xpose.msra.mxu0 0.0
      %1177 = vmatprep.subr.mxu0 0.0
      %1178 = vmatpush1.xpose.msra.mxu0 0.0
      %1179 = vmatprep.subr.mxu0 0.0
      %1180 = vmatpush1.xpose.msra.mxu0 0.0
      %1181 = vmatprep.subr.mxu0 0.0
      %1182 = vmatpush1.xpose.msra.mxu0 0.0
      %1183 = vmatprep.subr.mxu0 0.0
      %1184 = vmatpush1.xpose.msra.mxu0 0.0
      %1185 = vmatprep.mubr.f32.mxu0 0.0
      %1186 = vmatmul.mubr.f32.gmra.mrb[0].mxu0 %v1117
      %v1187 = vpop.f32.mrb[0].mxu0
      %v1188 = vadd.f32 0.0, %v1187
      %v1189 = vpop.f32.mrb[0].mxu0
      %1190 = vdwg.mxu0
      %1191 = vrot.lane.b32.xlu0 %v958, 96
      %v1192 = vpop.permute.xlu0 %1191
      %v1193 = vsel %vm964, %v958, 0
      %v1195 = vsel %vm964, %v1192, 0
      %1197 = vmatprep.subr.mxu0 0.0
      %1198 = vmatpush1.xpose.msra.mxu0 %v1195
      %1199 = vmatprep.subr.mxu0 0.0
      %1200 = vmatpush1.xpose.msra.mxu0 0.0
      %1201 = vmatprep.subr.mxu0 0.0
      %1202 = vmatpush1.xpose.msra.mxu0 0.0
      %1203 = vmatprep.subr.mxu0 0.0
      %1204 = vmatpush1.xpose.msra.mxu0 0.0
      %1205 = vmatprep.subr.mxu0 0.0
      %1206 = vmatpush1.xpose.msra.mxu0 0.0
      %1207 = vmatprep.subr.mxu0 0.0
      %1208 = vmatpush1.xpose.msra.mxu0 0.0
      %1209 = vmatprep.subr.mxu0 0.0
      %1210 = vmatpush1.xpose.msra.mxu0 0.0
      %1211 = vmatprep.subr.mxu0 0.0
      %1212 = vmatpush1.xpose.msra.mxu0 0.0
      %1213 = vmatprep.subr.mxu0 0.0
      %1214 = vmatpush1.xpose.msra.mxu0 0.0
      %1215 = vmatprep.subr.mxu0 0.0
      %1216 = vmatpush1.xpose.msra.mxu0 0.0
      %1217 = vmatprep.subr.mxu0 0.0
      %1218 = vmatpush1.xpose.msra.mxu0 0.0
      %1219 = vmatprep.subr.mxu0 0.0
      %1220 = vmatpush1.xpose.msra.mxu0 0.0
      %1221 = vmatprep.subr.mxu0 0.0
      %1222 = vmatpush1.xpose.msra.mxu0 0.0
      %1223 = vmatprep.subr.mxu0 0.0
      %1224 = vmatpush1.xpose.msra.mxu0 0.0
      %1225 = vmatprep.subr.mxu0 0.0
      %1226 = vmatpush1.xpose.msra.mxu0 0.0
      %1227 = vmatprep.subr.mxu0 0.0
      %1228 = vmatpush1.xpose.msra.mxu0 0.0
      %1229 = vmatprep.subr.mxu0 0.0
      %1230 = vmatpush1.xpose.msra.mxu0 0.0
      %1231 = vmatprep.subr.mxu0 0.0
      %1232 = vmatpush1.xpose.msra.mxu0 0.0
      %1233 = vmatprep.subr.mxu0 0.0
      %1234 = vmatpush1.xpose.msra.mxu0 0.0
      %1235 = vmatprep.subr.mxu0 0.0
      %1236 = vmatpush1.xpose.msra.mxu0 0.0
      %1237 = vmatprep.subr.mxu0 0.0
      %1238 = vmatpush1.xpose.msra.mxu0 0.0
      %1239 = vmatprep.subr.mxu0 0.0
      %1240 = vmatpush1.xpose.msra.mxu0 0.0
      %1241 = vmatprep.subr.mxu0 0.0
      %1242 = vmatpush1.xpose.msra.mxu0 0.0
      %1243 = vmatprep.subr.mxu0 0.0
      %1244 = vmatpush1.xpose.msra.mxu0 0.0
      %1245 = vmatprep.subr.mxu0 0.0
      %1246 = vmatpush1.xpose.msra.mxu0 0.0
      %1247 = vmatprep.subr.mxu0 0.0
      %1248 = vmatpush1.xpose.msra.mxu0 0.0
      %1249 = vmatprep.subr.mxu0 0.0
      %1250 = vmatpush1.xpose.msra.mxu0 0.0
      %1251 = vmatprep.subr.mxu0 0.0
      %1252 = vmatpush1.xpose.msra.mxu0 0.0
      %1253 = vmatprep.subr.mxu0 0.0
      %1254 = vmatpush1.xpose.msra.mxu0 0.0
      %1255 = vmatprep.subr.mxu0 0.0
      %1256 = vmatpush1.xpose.msra.mxu0 0.0
      %1257 = vmatprep.subr.mxu0 0.0
      %1258 = vmatpush1.xpose.msra.mxu0 0.0
      %1259 = vmatprep.subr.mxu0 0.0
      %1260 = vmatpush1.xpose.msra.mxu0 0.0
      %1261 = vmatprep.mubr.f32.mxu0 0.0
      %1262 = vmatmul.mubr.f32.gmra.mrb[0].mxu0 %v1193
      %v1263 = vpop.f32.mrb[0].mxu0
      %v1264 = vadd.f32 0.0, %v1263
      %v1265 = vpop.f32.mrb[0].mxu0
      %1266 = vdwg.mxu0
      %v1267 = vmul.f32 %v1036, 0.35355338
      %v1268 = vmul.f32 %v1112, 0.35355338
      %v1269 = vmul.f32 %v1188, 0.35355338
      %v1270 = vmul.f32 %v1264, 0.35355338
      %v1271 = vld [vmem:[%s794] sm:$0x1]
      %v1273 = vlaneseq
      %v1274 = vshrl.u32 %v1273, 7
      %v1275 = vsub.s32 0, %v1274
      %v1276 = vrot.slane %v1271, %v1275
      %v1278 = vadd.f32 %v1267, %v1276
      %v1279 = vadd.f32 %v1268, %v1276
      %v1280 = vadd.f32 %v1269, %v1276
      %v1281 = vadd.f32 %v1270, %v1276
      %v1282 = vsel %vm964, %v1278, -inf
      %1283 = vmax.xlane.f32.xlu0 %v1282
      %v1284 = vpop.xlane.xlu0 %1283
      %v1285 = vsel %vm964, %v1279, -inf
      %1286 = vmax.xlane.f32.xlu0 %v1285
      %v1287 = vpop.xlane.xlu0 %1286
      %v1288 = vsel %vm964, %v1280, -inf
      %1289 = vmax.xlane.f32.xlu0 %v1288
      %v1290 = vpop.xlane.xlu0 %1289
      %v1291 = vsel %vm964, %v1281, -inf
      %1292 = vmax.xlane.f32.xlu0 %v1291
      %v1293 = vpop.xlane.xlu0 %1292
      %v1294 = vsub.f32 %v1278, %v1284
      %v1295 = vsub.f32 %v1279, %v1287
      %v1296 = vsub.f32 %v1280, %v1290
      %v1297 = vsub.f32 %v1281, %v1293
      %v1298 = vmul.f32 %v1294, 1.442695
      %v1299 = vpow.pop %v1298
      %v1300 = vmul.f32 %v1295, 1.442695
      %v1301 = vpow.pop %v1300
      %v1302 = vmul.f32 %v1296, 1.442695
      %v1303 = vpow.pop %v1302
      %v1304 = vmul.f32 %v1297, 1.442695
      %v1305 = vpow.pop %v1304
      %v1306 = vsel %vm964, %v1299, 0.0
      %1307 = vadd.xlane.f32.xlu0 %v1306
      %v1308 = vpop.xlane.xlu0 %1307
      %v1309 = vsel %vm964, %v1301, 0.0
      %1310 = vadd.xlane.f32.xlu0 %v1309
      %v1311 = vpop.xlane.xlu0 %1310
      %v1312 = vsel %vm964, %v1303, 0.0
      %1313 = vadd.xlane.f32.xlu0 %v1312
      %v1314 = vpop.xlane.xlu0 %1313
      %v1315 = vsel %vm964, %v1305, 0.0
      %1316 = vadd.xlane.f32.xlu0 %v1315
      %v1317 = vpop.xlane.xlu0 %1316
      %v1318 = vrcp.pop %v1308
      %v1319 = vrcp.pop %v1311
      %v1320 = vrcp.pop %v1314
      %v1321 = vrcp.pop %v1317
      %v1322 = vmul.f32 %v1299, %v1318
      %v1323 = vmul.f32 %v1301, %v1319
      %v1324 = vmul.f32 %v1303, %v1320
      %v1325 = vmul.f32 %v1305, %v1321
      %v1326 = vpack.c.bf16 %v1322, %v1322
      %v1327 = vpack.c.bf16 %v1323, %v1323
      %v1328 = vpack.c.bf16 %v1324, %v1324
      %v1329 = vpack.c.bf16 %v1325, %v1325
      %v1330 = vpack.c.bf16 %v947, %v947
      %v1331 = vpack.c.bf16 %v954, %v954
      %v1332 = vpack.c.bf16 %v956, %v956
      %v1333 = vpack.c.bf16 %v958, %v958
      %1335 = vrot.lane.b32.xlu0 %v1330, 64
      %v1336 = vpop.permute.xlu0 %1335
      %v1338 = vsel %vm964, %v1326, 0
      %vm1340 = vcmask 1043456
      %v1342 = vsel %vm1340, %v1336, 0
      %1344 = vmatprep.subr.bf16.mxu0 0
      %1345 = vmatpush1.bf16.msra.mxu0 %v1342
      %1346 = vmatprep.subr.bf16.mxu0 0
      %1347 = vmatpush1.bf16.msra.mxu0 0
      %1348 = vmatprep.subr.bf16.mxu0 0
      %1349 = vmatpush1.bf16.msra.mxu0 0
      %1350 = vmatprep.subr.bf16.mxu0 0
      %1351 = vmatpush1.bf16.msra.mxu0 0
      %1352 = vmatprep.subr.bf16.mxu0 0
      %1353 = vmatpush1.bf16.msra.mxu0 0
      %1354 = vmatprep.subr.bf16.mxu0 0
      %1355 = vmatpush1.bf16.msra.mxu0 0
      %1356 = vmatprep.subr.bf16.mxu0 0
      %1357 = vmatpush1.bf16.msra.mxu0 0
      %1358 = vmatprep.subr.bf16.mxu0 0
      %1359 = vmatpush1.bf16.msra.mxu0 0
      %1360 = vmatprep.subr.bf16.mxu0 0
      %1361 = vmatpush1.bf16.msra.mxu0 0
      %1362 = vmatprep.subr.bf16.mxu0 0
      %1363 = vmatpush1.bf16.msra.mxu0 0
      %1364 = vmatprep.subr.bf16.mxu0 0
      %1365 = vmatpush1.bf16.msra.mxu0 0
      %1366 = vmatprep.subr.bf16.mxu0 0
      %1367 = vmatpush1.bf16.msra.mxu0 0
      %1368 = vmatprep.subr.bf16.mxu0 0
      %1369 = vmatpush1.bf16.msra.mxu0 0
      %1370 = vmatprep.subr.bf16.mxu0 0
      %1371 = vmatpush1.bf16.msra.mxu0 0
      %1372 = vmatprep.subr.bf16.mxu0 0
      %1373 = vmatpush1.bf16.msra.mxu0 0
      %1374 = vmatprep.subr.bf16.mxu0 0
      %1375 = vmatpush1.bf16.msra.mxu0 0
      %1376 = vmatprep.mubr.bf16.mxu0 0
      %1377 = vmatmul.mubr.bf16.gmra.mrb[0].mxu0 %v1338
      %v1378 = vpop.f32.mrb[0].mxu0
      %v1379 = vadd.f32 0.0, %v1378
      %v1380 = vpop.f32.mrb[0].mxu0
      %v1381 = vpop.f32.mrb[0].mxu0
      %v1382 = vpop.f32.mrb[0].mxu0
      %1383 = vdwg.mxu0
      %1385 = vrot.lane.b32.xlu0 %v1331, 64
      %v1386 = vpop.permute.xlu0 %1385
      %v1388 = vsel %vm964, %v1327, 0
      %v1391 = vsel %vm1340, %v1386, 0
      %1393 = vmatprep.subr.bf16.mxu0 0
      %1394 = vmatpush1.bf16.msra.mxu0 %v1391
      %1395 = vmatprep.subr.bf16.mxu0 0
      %1396 = vmatpush1.bf16.msra.mxu0 0
      %1397 = vmatprep.subr.bf16.mxu0 0
      %1398 = vmatpush1.bf16.msra.mxu0 0
      %1399 = vmatprep.subr.bf16.mxu0 0
      %1400 = vmatpush1.bf16.msra.mxu0 0
      %1401 = vmatprep.subr.bf16.mxu0 0
      %1402 = vmatpush1.bf16.msra.mxu0 0
      %1403 = vmatprep.subr.bf16.mxu0 0
      %1404 = vmatpush1.bf16.msra.mxu0 0
      %1405 = vmatprep.subr.bf16.mxu0 0
      %1406 = vmatpush1.bf16.msra.mxu0 0
      %1407 = vmatprep.subr.bf16.mxu0 0
      %1408 = vmatpush1.bf16.msra.mxu0 0
      %1409 = vmatprep.subr.bf16.mxu0 0
      %1410 = vmatpush1.bf16.msra.mxu0 0
      %1411 = vmatprep.subr.bf16.mxu0 0
      %1412 = vmatpush1.bf16.msra.mxu0 0
      %1413 = vmatprep.subr.bf16.mxu0 0
      %1414 = vmatpush1.bf16.msra.mxu0 0
      %1415 = vmatprep.subr.bf16.mxu0 0
      %1416 = vmatpush1.bf16.msra.mxu0 0
      %1417 = vmatprep.subr.bf16.mxu0 0
      %1418 = vmatpush1.bf16.msra.mxu0 0
      %1419 = vmatprep.subr.bf16.mxu0 0
      %1420 = vmatpush1.bf16.msra.mxu0 0
      %1421 = vmatprep.subr.bf16.mxu0 0
      %1422 = vmatpush1.bf16.msra.mxu0 0
      %1423 = vmatprep.subr.bf16.mxu0 0
      %1424 = vmatpush1.bf16.msra.mxu0 0
      %1425 = vmatprep.mubr.bf16.mxu0 0
      %1426 = vmatmul.mubr.bf16.gmra.mrb[0].mxu0 %v1388
      %v1427 = vpop.f32.mrb[0].mxu0
      %v1428 = vadd.f32 0.0, %v1427
      %v1429 = vpop.f32.mrb[0].mxu0
      %v1430 = vpop.f32.mrb[0].mxu0
      %v1431 = vpop.f32.mrb[0].mxu0
      %1432 = vdwg.mxu0
      %1434 = vrot.lane.b32.xlu0 %v1332, 64
      %v1435 = vpop.permute.xlu0 %1434
      %v1437 = vsel %vm964, %v1328, 0
      %v1440 = vsel %vm1340, %v1435, 0
      %1442 = vmatprep.subr.bf16.mxu0 0
      %1443 = vmatpush1.bf16.msra.mxu0 %v1440
      %1444 = vmatprep.subr.bf16.mxu0 0
      %1445 = vmatpush1.bf16.msra.mxu0 0
      %1446 = vmatprep.subr.bf16.mxu0 0
      %1447 = vmatpush1.bf16.msra.mxu0 0
      %1448 = vmatprep.subr.bf16.mxu0 0
      %1449 = vmatpush1.bf16.msra.mxu0 0
      %1450 = vmatprep.subr.bf16.mxu0 0
      %1451 = vmatpush1.bf16.msra.mxu0 0
      %1452 = vmatprep.subr.bf16.mxu0 0
      %1453 = vmatpush1.bf16.msra.mxu0 0
      %1454 = vmatprep.subr.bf16.mxu0 0
      %1455 = vmatpush1.bf16.msra.mxu0 0
      %1456 = vmatprep.subr.bf16.mxu0 0
      %1457 = vmatpush1.bf16.msra.mxu0 0
      %1458 = vmatprep.subr.bf16.mxu0 0
      %1459 = vmatpush1.bf16.msra.mxu0 0
      %1460 = vmatprep.subr.bf16.mxu0 0
      %1461 = vmatpush1.bf16.msra.mxu0 0
      %1462 = vmatprep.subr.bf16.mxu0 0
      %1463 = vmatpush1.bf16.msra.mxu0 0
      %1464 = vmatprep.subr.bf16.mxu0 0
      %1465 = vmatpush1.bf16.msra.mxu0 0
      %1466 = vmatprep.subr.bf16.mxu0 0
      %1467 = vmatpush1.bf16.msra.mxu0 0
      %1468 = vmatprep.subr.bf16.mxu0 0
      %1469 = vmatpush1.bf16.msra.mxu0 0
      %1470 = vmatprep.subr.bf16.mxu0 0
      %1471 = vmatpush1.bf16.msra.mxu0 0
      %1472 = vmatprep.subr.bf16.mxu0 0
      %1473 = vmatpush1.bf16.msra.mxu0 0
      %1474 = vmatprep.mubr.bf16.mxu0 0
      %1475 = vmatmul.mubr.bf16.gmra.mrb[0].mxu0 %v1437
      %v1476 = vpop.f32.mrb[0].mxu0
      %v1477 = vadd.f32 0.0, %v1476
      %v1478 = vpop.f32.mrb[0].mxu0
      %v1479 = vpop.f32.mrb[0].mxu0
      %v1480 = vpop.f32.mrb[0].mxu0
      %1481 = vdwg.mxu0
      %1483 = vrot.lane.b32.xlu0 %v1333, 64
      %v1484 = vpop.permute.xlu0 %1483
      %v1486 = vsel %vm964, %v1329, 0
      %v1489 = vsel %vm1340, %v1484, 0
      %1491 = vmatprep.subr.bf16.mxu0 0
      %1492 = vmatpush1.bf16.msra.mxu0 %v1489
      %1493 = vmatprep.subr.bf16.mxu0 0
      %1494 = vmatpush1.bf16.msra.mxu0 0
      %1495 = vmatprep.subr.bf16.mxu0 0
      %1496 = vmatpush1.bf16.msra.mxu0 0
      %1497 = vmatprep.subr.bf16.mxu0 0
      %1498 = vmatpush1.bf16.msra.mxu0 0
      %1499 = vmatprep.subr.bf16.mxu0 0
      %1500 = vmatpush1.bf16.msra.mxu0 0
      %1501 = vmatprep.subr.bf16.mxu0 0
      %1502 = vmatpush1.bf16.msra.mxu0 0
      %1503 = vmatprep.subr.bf16.mxu0 0
      %1504 = vmatpush1.bf16.msra.mxu0 0
      %1505 = vmatprep.subr.bf16.mxu0 0
      %1506 = vmatpush1.bf16.msra.mxu0 0
      %1507 = vmatprep.subr.bf16.mxu0 0
      %1508 = vmatpush1.bf16.msra.mxu0 0
      %1509 = vmatprep.subr.bf16.mxu0 0
      %1510 = vmatpush1.bf16.msra.mxu0 0
      %1511 = vmatprep.subr.bf16.mxu0 0
      %1512 = vmatpush1.bf16.msra.mxu0 0
      %1513 = vmatprep.subr.bf16.mxu0 0
      %1514 = vmatpush1.bf16.msra.mxu0 0
      %1515 = vmatprep.subr.bf16.mxu0 0
      %1516 = vmatpush1.bf16.msra.mxu0 0
      %1517 = vmatprep.subr.bf16.mxu0 0
      %1518 = vmatpush1.bf16.msra.mxu0 0
      %1519 = vmatprep.subr.bf16.mxu0 0
      %1520 = vmatpush1.bf16.msra.mxu0 0
      %1521 = vmatprep.subr.bf16.mxu0 0
      %1522 = vmatpush1.bf16.msra.mxu0 0
      %1523 = vmatprep.mubr.bf16.mxu0 0
      %1524 = vmatmul.mubr.bf16.gmra.mrb[0].mxu0 %v1486
      %v1525 = vpop.f32.mrb[0].mxu0
      %v1526 = vadd.f32 0.0, %v1525
      %v1527 = vpop.f32.mrb[0].mxu0
      %v1528 = vpop.f32.mrb[0].mxu0
      %v1529 = vpop.f32.mrb[0].mxu0
      %1530 = vdwg.mxu0
      %1531 = vst.msk [vmem:[#allocation3] sm:$0xff] %vm964, %v1379
      %1533 = vrot.lane.b32.xlu0 %v1428, 8
      %v1534 = vpop.permute.xlu0 %1533
      %vm1536 = vcmask 130112
      %1537 = vst.msk [vmem:[#allocation3] sm:$0xff] %vm1536, %v1534
      %1539 = vrot.lane.b32.xlu0 %v1477, 16
      %v1540 = vpop.permute.xlu0 %1539
      %vm1542 = vcmask 195712
      %1543 = vst.msk [vmem:[#allocation3] sm:$0xff] %vm1542, %v1540
      %1545 = vrot.lane.b32.xlu0 %v1526, 24
      %v1546 = vpop.permute.xlu0 %1545
      %vm1548 = vcmask 261312
      %1549 = vst.msk [vmem:[#allocation3] sm:$0xff] %vm1548, %v1546
      %v1550 = vld [vmem:[#allocation3] sm:$0xff]
      %v1551 = vpack.c.bf16 %v1550, %v1550
      %v1552 = vld [vmem:[%s807] sm:$0xf]
      %v1553 = vld [vmem:[%s807 + $0x4] sm:$0xf]
      %v1554 = vld [vmem:[%s807 + $0x8] sm:$0xf]
      %v1555 = vld [vmem:[%s807 + $0xc] sm:$0xf]
      %v1556 = vld [vmem:[%s810] sm:$0x1]
      %v1558 = vlaneseq
      %v1559 = vshrl.u32 %v1558, 7
      %v1560 = vsub.s32 0, %v1559
      %v1561 = vrot.slane %v1556, %v1560
      %v1567 = vunpack.c.l.b16 %v1552
      %v1568 = vunpack.c.l.b16 %v1553
      %v1569 = vunpack.c.l.b16 %v1554
      %v1570 = vunpack.c.l.b16 %v1555
      %v1571 = vpack.c.b16 %v1568, %v1567
      %v1572 = vpack.c.b16 %v1570, %v1569
      %v1576 = vsel %vm908, %v1551, 0
      %1578 = vmatprep.subr.bf16.mxu0 0
      %1579 = vmatpush1.bf16.msra.mxu0 %v1571
      %1580 = vmatprep.subr.bf16.mxu0 0
      %1581 = vmatpush1.bf16.msra.mxu0 %v1572
      %1582 = vmatprep.subr.bf16.mxu0 0
      %1583 = vmatpush1.bf16.msra.mxu0 0
      %1584 = vmatprep.subr.bf16.mxu0 0
      %1585 = vmatpush1.bf16.msra.mxu0 0
      %1586 = vmatprep.subr.bf16.mxu0 0
      %1587 = vmatpush1.bf16.msra.mxu0 0
      %1588 = vmatprep.subr.bf16.mxu0 0
      %1589 = vmatpush1.bf16.msra.mxu0 0
      %1590 = vmatprep.subr.bf16.mxu0 0
      %1591 = vmatpush1.bf16.msra.mxu0 0
      %1592 = vmatprep.subr.bf16.mxu0 0
      %1593 = vmatpush1.bf16.msra.mxu0 0
      %1594 = vmatprep.subr.bf16.mxu0 0
      %1595 = vmatpush1.bf16.msra.mxu0 0
      %1596 = vmatprep.subr.bf16.mxu0 0
      %1597 = vmatpush1.bf16.msra.mxu0 0
      %1598 = vmatprep.subr.bf16.mxu0 0
      %1599 = vmatpush1.bf16.msra.mxu0 0
      %1600 = vmatprep.subr.bf16.mxu0 0
      %1601 = vmatpush1.bf16.msra.mxu0 0
      %1602 = vmatprep.subr.bf16.mxu0 0
      %1603 = vmatpush1.bf16.msra.mxu0 0
      %1604 = vmatprep.subr.bf16.mxu0 0
      %1605 = vmatpush1.bf16.msra.mxu0 0
      %1606 = vmatprep.subr.bf16.mxu0 0
      %1607 = vmatpush1.bf16.msra.mxu0 0
      %1608 = vmatprep.subr.bf16.mxu0 0
      %1609 = vmatpush1.bf16.msra.mxu0 0
      %1610 = vmatprep.mubr.bf16.mxu0 0
      %1611 = vmatmul.mubr.bf16.gmra.mrb[0].mxu0 %v1576
      %v1612 = vpop.f32.mrb[0].mxu0
      %v1613 = vadd.f32 %v1561, %v1612
      %v1614 = vpop.f32.mrb[0].mxu0
      %v1615 = vpop.f32.mrb[0].mxu0
      %v1616 = vpop.f32.mrb[0].mxu0
      %1617 = vdwg.mxu0
      %v1618 = vadd.f32 %v883, %v1613
      %v1619 = vld [vmem:[%s813] sm:$0x1]
      %v1620 = vld [vmem:[%s816] sm:$0x1]
      %v1621 = vsel %vm908, %v1618, 0.0
      %1622 = vadd.xlane.f32.xlu0 %v1621
      %v1623 = vpop.xlane.xlu0 %1622
      %v1624 = vrcp.pop 32.0
      %v1625 = vmul.f32 %v1623, %v1624
      %v1626 = vmul.f32 %v1618, %v1618
      %v1627 = vsel %vm908, %v1626, 0.0
      %1628 = vadd.xlane.f32.xlu0 %v1627
      %v1629 = vpop.xlane.xlu0 %1628
      %v1630 = vmul.f32 %v1629, %v1624
      %v1631 = vmul.f32 %v1625, %v1625
      %v1632 = vsub.f32 %v1630, %v1631
      %v1633 = vsub.f32 %v1618, %v1625
      %v1634 = vadd.f32 %v1632, 1e-12
      %v1635 = vrsqrt.pop %v1634
      %v1636 = vmul.f32 %v1633, %v1635
      %v1638 = vlaneseq
      %v1639 = vshrl.u32 %v1638, 7
      %v1640 = vsub.s32 0, %v1639
      %v1641 = vrot.slane %v1619, %v1640
      %v1643 = vmul.f32 %v1636, %v1641
      %v1645 = vlaneseq
      %v1646 = vshrl.u32 %v1645, 7
      %v1647 = vsub.s32 0, %v1646
      %v1648 = vrot.slane %v1620, %v1647
      %v1650 = vadd.f32 %v1643, %v1648
      %v1651 = vpack.c.bf16 %v1650, %v1650
      %v1652 = vld [vmem:[%s821] sm:$0xf]
      %v1653 = vld [vmem:[%s821 + $0x4] sm:$0xf]
      %v1654 = vld [vmem:[%s821 + $0x8] sm:$0xf]
      %v1655 = vld [vmem:[%s821 + $0xc] sm:$0xf]
      %v1656 = vld [vmem:[%s824] sm:$0x1]
      %v1658 = vlaneseq
      %v1659 = vshrl.u32 %v1658, 7
      %v1660 = vsub.s32 0, %v1659
      %v1661 = vrot.slane %v1656, %v1660
      %v1667 = vunpack.c.l.b16 %v1652
      %v1668 = vunpack.c.l.b16 %v1653
      %v1669 = vunpack.c.l.b16 %v1654
      %v1670 = vunpack.c.l.b16 %v1655
      %v1671 = vpack.c.b16 %v1668, %v1667
      %v1672 = vpack.c.b16 %v1670, %v1669
      %v1676 = vsel %vm908, %v1651, 0
      %1678 = vmatprep.subr.bf16.mxu0 0
      %1679 = vmatpush1.bf16.msra.mxu0 %v1671
      %1680 = vmatprep.subr.bf16.mxu0 0
      %1681 = vmatpush1.bf16.msra.mxu0 %v1672
      %1682 = vmatprep.subr.bf16.mxu0 0
      %1683 = vmatpush1.bf16.msra.mxu0 0
      %1684 = vmatprep.subr.bf16.mxu0 0
      %1685 = vmatpush1.bf16.msra.mxu0 0
      %1686 = vmatprep.subr.bf16.mxu0 0
      %1687 = vmatpush1.bf16.msra.mxu0 0
      %1688 = vmatprep.subr.bf16.mxu0 0
      %1689 = vmatpush1.bf16.msra.mxu0 0
      %1690 = vmatprep.subr.bf16.mxu0 0
      %1691 = vmatpush1.bf16.msra.mxu0 0
      %1692 = vmatprep.subr.bf16.mxu0 0
      %1693 = vmatpush1.bf16.msra.mxu0 0
      %1694 = vmatprep.subr.bf16.mxu0 0
      %1695 = vmatpush1.bf16.msra.mxu0 0
      %1696 = vmatprep.subr.bf16.mxu0 0
      %1697 = vmatpush1.bf16.msra.mxu0 0
      %1698 = vmatprep.subr.bf16.mxu0 0
      %1699 = vmatpush1.bf16.msra.mxu0 0
      %1700 = vmatprep.subr.bf16.mxu0 0
      %1701 = vmatpush1.bf16.msra.mxu0 0
      %1702 = vmatprep.subr.bf16.mxu0 0
      %1703 = vmatpush1.bf16.msra.mxu0 0
      %1704 = vmatprep.subr.bf16.mxu0 0
      %1705 = vmatpush1.bf16.msra.mxu0 0
      %1706 = vmatprep.subr.bf16.mxu0 0
      %1707 = vmatpush1.bf16.msra.mxu0 0
      %1708 = vmatprep.subr.bf16.mxu0 0
      %1709 = vmatpush1.bf16.msra.mxu0 0
      %1710 = vmatprep.mubr.bf16.mxu0 0
      %1711 = vmatmul.mubr.bf16.gmra.mrb[0].mxu0 %v1676
      %v1712 = vpop.f32.mrb[0].mxu0
      %v1713 = vadd.f32 %v1661, %v1712
      %v1714 = vpop.f32.mrb[0].mxu0
      %v1715 = vpop.f32.mrb[0].mxu0
      %v1716 = vpop.f32.mrb[0].mxu0
      %1717 = vdwg.mxu0
      %v1718 = vmul.f32 %v1713, 0.5
      %v1719 = vmul.f32 %v1713, 0.044715
      %v1720 = vmul.f32 %v1719, %v1713
      %v1721 = vmul.f32 %v1720, %v1713
      %v1722 = vadd.f32 %v1713, %v1721
      %v1723 = vmul.f32 %v1722, 0.7978846
      %v1724 = vtanh.pop %v1723
      %v1725 = vadd.f32 %v1724, 1.0
      %v1726 = vmul.f32 %v1718, %v1725
      %v1727 = vpack.c.bf16 %v1726, %v1726
      %v1728 = vld [vmem:[%s829] sm:$0xf]
      %v1729 = vld [vmem:[%s829 + $0x4] sm:$0xf]
      %v1730 = vld [vmem:[%s829 + $0x8] sm:$0xf]
      %v1731 = vld [vmem:[%s829 + $0xc] sm:$0xf]
      %v1732 = vld [vmem:[%s829 + $0x10] sm:$0xf]
      %v1733 = vld [vmem:[%s829 + $0x14] sm:$0xf]
      %v1734 = vld [vmem:[%s829 + $0x18] sm:$0xf]
      %v1735 = vld [vmem:[%s829 + $0x1c] sm:$0xf]
      %v1736 = vld [vmem:[%s832] sm:$0x1]
      %v1738 = vlaneseq
      %v1739 = vshrl.u32 %v1738, 7
      %v1740 = vsub.s32 0, %v1739
      %v1741 = vrot.slane %v1736, %v1740
      %v1751 = vunpack.c.l.b16 %v1728
      %v1752 = vunpack.c.l.b16 %v1729
      %v1753 = vunpack.c.l.b16 %v1730
      %v1754 = vunpack.c.l.b16 %v1731
      %v1755 = vunpack.c.l.b16 %v1732
      %v1756 = vunpack.c.l.b16 %v1733
      %v1757 = vunpack.c.l.b16 %v1734
      %v1758 = vunpack.c.l.b16 %v1735
      %v1759 = vpack.c.b16 %v1752, %v1751
      %v1760 = vpack.c.b16 %v1754, %v1753
      %v1761 = vpack.c.b16 %v1756, %v1755
      %v1762 = vpack.c.b16 %v1758, %v1757
      %vm1767 = vcmask 523264
      %v1769 = vsel %vm1767, %v1727, 0
      %1771 = vmatprep.subr.bf16.mxu0 0
      %1772 = vmatpush1.bf16.msra.mxu0 %v1759
      %1773 = vmatprep.subr.bf16.mxu0 0
      %1774 = vmatpush1.bf16.msra.mxu0 %v1760
      %1775 = vmatprep.subr.bf16.mxu0 0
      %1776 = vmatpush1.bf16.msra.mxu0 %v1761
      %1777 = vmatprep.subr.bf16.mxu0 0
      %1778 = vmatpush1.bf16.msra.mxu0 %v1762
      %1779 = vmatprep.subr.bf16.mxu0 0
      %1780 = vmatpush1.bf16.msra.mxu0 0
      %1781 = vmatprep.subr.bf16.mxu0 0
      %1782 = vmatpush1.bf16.msra.mxu0 0
      %1783 = vmatprep.subr.bf16.mxu0 0
      %1784 = vmatpush1.bf16.msra.mxu0 0
      %1785 = vmatprep.subr.bf16.mxu0 0
      %1786 = vmatpush1.bf16.msra.mxu0 0
      %1787 = vmatprep.subr.bf16.mxu0 0
      %1788 = vmatpush1.bf16.msra.mxu0 0
      %1789 = vmatprep.subr.bf16.mxu0 0
      %1790 = vmatpush1.bf16.msra.mxu0 0
      %1791 = vmatprep.subr.bf16.mxu0 0
      %1792 = vmatpush1.bf16.msra.mxu0 0
      %1793 = vmatprep.subr.bf16.mxu0 0
      %1794 = vmatpush1.bf16.msra.mxu0 0
      %1795 = vmatprep.subr.bf16.mxu0 0
      %1796 = vmatpush1.bf16.msra.mxu0 0
      %1797 = vmatprep.subr.bf16.mxu0 0
      %1798 = vmatpush1.bf16.msra.mxu0 0
      %1799 = vmatprep.subr.bf16.mxu0 0
      %1800 = vmatpush1.bf16.msra.mxu0 0
      %1801 = vmatprep.subr.bf16.mxu0 0
      %1802 = vmatpush1.bf16.msra.mxu0 0
      %1803 = vmatprep.mubr.bf16.mxu0 0
      %1804 = vmatmul.mubr.bf16.gmra.mrb[0].mxu0 %v1769
      %v1805 = vpop.f32.mrb[0].mxu0
      %v1806 = vadd.f32 %v1741, %v1805
      %v1807 = vpop.f32.mrb[0].mxu0
      %v1808 = vpop.f32.mrb[0].mxu0
      %v1809 = vpop.f32.mrb[0].mxu0
      %1810 = vdwg.mxu0
      %v1811 = vadd.f32 %v1650, %v1806
      %v1812 = vld [vmem:[%s835] sm:$0x1]
      %v1813 = vld [vmem:[%s838] sm:$0x1]
      %v1814 = vsel %vm908, %v1811, 0.0
      %1815 = vadd.xlane.f32.xlu0 %v1814
      %v1816 = vpop.xlane.xlu0 %1815
      %v1817 = vmul.f32 %v1816, %v1624
      %v1818 = vmul.f32 %v1811, %v1811
      %v1819 = vsel %vm908, %v1818, 0.0
      %1820 = vadd.xlane.f32.xlu0 %v1819
      %v1821 = vpop.xlane.xlu0 %1820
      %v1822 = vmul.f32 %v1821, %v1624
      %v1823 = vmul.f32 %v1817, %v1817
      %v1824 = vsub.f32 %v1822, %v1823
      %v1825 = vsub.f32 %v1811, %v1817
      %v1826 = vadd.f32 %v1824, 1e-12
      %v1827 = vrsqrt.pop %v1826
      %v1828 = vmul.f32 %v1825, %v1827
      %v1830 = vlaneseq
      %v1831 = vshrl.u32 %v1830, 7
      %v1832 = vsub.s32 0, %v1831
      %v1833 = vrot.slane %v1812, %v1832
      %v1835 = vmul.f32 %v1828, %v1833
      %v1837 = vlaneseq
      %v1838 = vshrl.u32 %v1837, 7
      %v1839 = vsub.s32 0, %v1838
      %v1840 = vrot.slane %v1813, %v1839
      %v1842 = vadd.f32 %v1835, %v1840
      %1843 = vst.msk [vmem:[#allocation2] sm:$0xff] %vm908, %v1842
      %p1844 = scmp.eq.s32.totalorder %s36, 1
      // Predicated region
      $region105: #{_lambda_.1} parent=99 // pred_check
        %p1845 = pneg %p1844
      $region106: #{_lambda_.1} parent=99 // pred_check_branch
        %1847 = sbr.rel (%p1845) target = $region108
      $region107: #{_lambda_.1} parent=99 // pred_region
        %v1848 = vpack.c.bf16 %v1842, %v1842
        %v1849 = vld [vmem:[%s16] sm:$0xf]
        %v1850 = vld [vmem:[%s16 + $0x4] sm:$0xf]
        %v1851 = vld [vmem:[%s16 + $0x8] sm:$0xf]
        %v1852 = vld [vmem:[%s16 + $0xc] sm:$0xf]
        %v1853 = vld [vmem:[%s17] sm:$0x1]
        %v1858 = vunpack.c.l.b16 %v1849
        %v1859 = vunpack.c.l.b16 %v1850
        %v1860 = vunpack.c.l.b16 %v1851
        %v1861 = vunpack.c.l.b16 %v1852
        %v1862 = vpack.c.b16 %v1859, %v1858
        %v1863 = vpack.c.b16 %v1861, %v1860
        %v1867 = vsel %vm908, %v1848, 0
        %1869 = vmatprep.subr.bf16.mxu0 0
        %1870 = vmatpush1.bf16.msra.mxu0 %v1862
        %1871 = vmatprep.subr.bf16.mxu0 0
        %1872 = vmatpush1.bf16.msra.mxu0 %v1863
        %1873 = vmatprep.subr.bf16.mxu0 0
        %1874 = vmatpush1.bf16.msra.mxu0 0
        %1875 = vmatprep.subr.bf16.mxu0 0
        %1876 = vmatpush1.bf16.msra.mxu0 0
        %1877 = vmatprep.subr.bf16.mxu0 0
        %1878 = vmatpush1.bf16.msra.mxu0 0
        %1879 = vmatprep.subr.bf16.mxu0 0
        %1880 = vmatpush1.bf16.msra.mxu0 0
        %1881 = vmatprep.subr.bf16.mxu0 0
        %1882 = vmatpush1.bf16.msra.mxu0 0
        %1883 = vmatprep.subr.bf16.mxu0 0
        %1884 = vmatpush1.bf16.msra.mxu0 0
        %1885 = vmatprep.subr.bf16.mxu0 0
        %1886 = vmatpush1.bf16.msra.mxu0 0
        %1887 = vmatprep.subr.bf16.mxu0 0
        %1888 = vmatpush1.bf16.msra.mxu0 0
        %1889 = vmatprep.subr.bf16.mxu0 0
        %1890 = vmatpush1.bf16.msra.mxu0 0
        %1891 = vmatprep.subr.bf16.mxu0 0
        %1892 = vmatpush1.bf16.msra.mxu0 0
        %1893 = vmatprep.subr.bf16.mxu0 0
        %1894 = vmatpush1.bf16.msra.mxu0 0
        %1895 = vmatprep.subr.bf16.mxu0 0
        %1896 = vmatpush1.bf16.msra.mxu0 0
        %1897 = vmatprep.subr.bf16.mxu0 0
        %1898 = vmatpush1.bf16.msra.mxu0 0
        %1899 = vmatprep.subr.bf16.mxu0 0
        %1900 = vmatpush1.bf16.msra.mxu0 0
        %1901 = vmatprep.mubr.bf16.mxu0 0
        %1902 = vmatmul.mubr.bf16.gmra.mrb[0].mxu0 %v1867
        %v1903 = vpop.f32.mrb[0].mxu0
        %v1904 = vadd.f32 %v1853, %v1903
        %v1905 = vpop.f32.mrb[0].mxu0
        %v1906 = vpop.f32.mrb[0].mxu0
        %v1907 = vpop.f32.mrb[0].mxu0
        %1908 = vdwg.mxu0
        %v1909 = vtanh.pop %v1904
        %v1910 = vpack.c.bf16 %v1909, %v1909
        %v1911 = vld [vmem:[%s18] sm:$0xff]
        %v1912 = vld [vmem:[%s18 + $0x8] sm:$0xff]
        %v1913 = vld [vmem:[%s18 + $0x10] sm:$0xff]
        %v1914 = vld [vmem:[%s18 + $0x18] sm:$0xff]
        %v1915 = vld [vmem:[%s19] sm:$0x3]
        %v1920 = vunpack.c.l.b16 %v1911
        %v1921 = vunpack.c.h.b16 %v1911
        %v1922 = vunpack.c.l.b16 %v1912
        %v1923 = vunpack.c.h.b16 %v1912
        %v1924 = vunpack.c.l.b16 %v1913
        %v1925 = vunpack.c.h.b16 %v1913
        %v1926 = vunpack.c.l.b16 %v1914
        %v1927 = vunpack.c.h.b16 %v1914
        %v1928 = vpack.c.b16 %v1922, %v1920
        %v1929 = vpack.c.b16 %v1923, %v1921
        %v1930 = vpack.c.b16 %v1926, %v1924
        %v1931 = vpack.c.b16 %v1927, %v1925
        %v1937 = vlaneseq
        %v1938 = vshrl.u32 %v1937, 7
        %v1939 = vsub.s32 0, %v1938
        %v1940 = vrot.slane %v1915, %v1939
        %v1941 = vlaneseq
        %v1942 = vshrl.u32 %v1941, 7
        %v1943 = vsub.s32 1, %v1942
        %v1944 = vrot.slane %v1915, %v1943
        %v1948 = vsel %vm908, %v1910, 0
        %1950 = vmatprep.subr.bf16.mxu0 %v1929
        %1951 = vmatpush1.bf16.msra.mxu0 %v1928
        %1952 = vmatprep.subr.bf16.mxu0 %v1931
        %1953 = vmatpush1.bf16.msra.mxu0 %v1930
        %1954 = vmatprep.subr.bf16.mxu0 0
        %1955 = vmatpush1.bf16.msra.mxu0 0
        %1956 = vmatprep.subr.bf16.mxu0 0
        %1957 = vmatpush1.bf16.msra.mxu0 0
        %1958 = vmatprep.subr.bf16.mxu0 0
        %1959 = vmatpush1.bf16.msra.mxu0 0
        %1960 = vmatprep.subr.bf16.mxu0 0
        %1961 = vmatpush1.bf16.msra.mxu0 0
        %1962 = vmatprep.subr.bf16.mxu0 0
        %1963 = vmatpush1.bf16.msra.mxu0 0
        %1964 = vmatprep.subr.bf16.mxu0 0
        %1965 = vmatpush1.bf16.msra.mxu0 0
        %1966 = vmatprep.subr.bf16.mxu0 0
        %1967 = vmatpush1.bf16.msra.mxu0 0
        %1968 = vmatprep.subr.bf16.mxu0 0
        %1969 = vmatpush1.bf16.msra.mxu0 0
        %1970 = vmatprep.subr.bf16.mxu0 0
        %1971 = vmatpush1.bf16.msra.mxu0 0
        %1972 = vmatprep.subr.bf16.mxu0 0
        %1973 = vmatpush1.bf16.msra.mxu0 0
        %1974 = vmatprep.subr.bf16.mxu0 0
        %1975 = vmatpush1.bf16.msra.mxu0 0
        %1976 = vmatprep.subr.bf16.mxu0 0
        %1977 = vmatpush1.bf16.msra.mxu0 0
        %1978 = vmatprep.subr.bf16.mxu0 0
        %1979 = vmatpush1.bf16.msra.mxu0 0
        %1980 = vmatprep.subr.bf16.mxu0 0
        %1981 = vmatpush1.bf16.msra.mxu0 0
        %1982 = vmatprep.mubr.bf16.mxu0 0
        %1983 = vmatmul.mubr.bf16.gmra.mrb[0].mxu0 %v1948
        %v1984 = vpop.f32.mrb[0].mxu0
        %v1985 = vadd.f32 %v1940, %v1984
        %v1986 = vpop.f32.mrb[0].mxu0
        %v1987 = vadd.f32 %v1944, %v1986
        %v1988 = vpop.f32.mrb[0].mxu0
        %v1989 = vpop.f32.mrb[0].mxu0
        %1990 = vdwg.mxu0
        %v1993 = vcombine.low %v1985, %v1987
        %v1995 = vunpack.c.l.s4 1966171168
        %v1996 = vunpack.c.0.s8 %v1995
        %v1997 = vlaneseq
        %v1998 = vshrl.u32 %v1997, 7
        %v1999 = vsub.s32 %v1996, %v1998
        %v2000 = vrot.slane %v1993, %v1999
        %v2002 = vunpack.c.l.s4 1966171168
        %v2003 = vunpack.c.0.s8 %v2002
        %v2004 = vlaneseq
        %v2005 = vshrl.u32 %v2004, 7
        %v2006 = vsub.s32 %v2003, %v2005
        %v2007 = vrot.slane %v2000, %v2006
        %v2009 = vlaneseq
        %vm2010 = vcmp.ge.s32.totalorder %v2009, 0
        %vm2011 = vcmp.lt.s32.totalorder %v2009, 256
        %vm2012 = vmand %vm2010, %vm2011
        %2013 = vst.msk [vmem:[%s842] sm:$0x3] %vm2012, %v2007
      $region108: #{_lambda_.1} parent=99 // pred_fallthru
        _
      %p2014 = scmp.lt.s32.totalorder %s35, 1
      %s2015 = scalar_select %p2014, %s35, 1
      %s2016 = smul.addr %s2015, 2
      %s2017 = scalar_lea.vmem %s20, %s2016
      // Predicated region
      $region109: #{_lambda_.1} parent=99 // pred_check
        %p2018 = pneg %p551
      $region110: #{_lambda_.1} parent=99 // pred_check_branch
        %2020 = sbr.rel (%p2018) target = $region112
      $region111: #{_lambda_.1} parent=99 // pred_region
        _
      $region112: #{_lambda_.1} parent=99 // pred_fallthru
        _
    $region100: #{_lambda_.1} parent=5 // pred_fallthru
      _
    %p2021 = scmp.le.s32.totalorder 2, %s26
    // Predicated region
    $region113: #{_lambda_.1} parent=5 // pred_check
      %p2022 = pneg %p2021
    $region114: #{_lambda_.1} parent=5 // pred_check_branch
      %2024 = sbr.rel (%p2022) target = $region116
    $region115: #{_lambda_.1} parent=5 // pred_region
      %s2025 = ssub.s32 %s26, 2
      // Predicated region
      $region117: #{_lambda_.1} parent=115 // pred_check
        %p2026 = pneg %p557
      $region118: #{_lambda_.1} parent=115 // pred_check_branch
        %2028 = sbr.rel (%p2026) target = $region120
      $region119: #{_lambda_.1} parent=115 // pred_region
        %p2029 = scmp.lt.s32.totalorder %s37, 1
        %s2030 = scalar_select %p2029, %s37, 1
        %s2031 = smul.addr %s2030, 2
        %s2032 = scalar_lea.vmem %s20, %s2031
      $region120: #{_lambda_.1} parent=115 // pred_fallthru
        _
    $region116: #{_lambda_.1} parent=5 // pred_fallthru
      _
  $region6: #{_lambda_.1} parent=0 // loop_footer
    %s30 = sadd.s32 1, %s26
  $region7: #{_lambda_.1} parent=0 // loop_footer_branch
    %25 = sbr.rel target = $region3
  $region8: #{_lambda_.1} parent=0 // loop_exit
    _

</llo_original>
